<compile_context>
chip_gen: v6e
topology: v6e:2x2x1
jax: 0.10.0
libtpu: 0.0.40
codegen_flags: <defaults>
</compile_context>

<pallas_src>
import functools

import jax
import jax.numpy as jnp
from jax.experimental import pallas as pl
from jax.experimental.pallas import tpu as pltpu


def _round_up(x, m):
    return (x + m - 1) // m * m


# -----------------------------------------------------------------------------
# Pallas kernel 1: matmul + bias.
# Used for (a) the hoisted per-layer input projection of both LSTM directions
# at once and (b) the hidden2tag head. Shapes are tiny, so a single full-array
# block (grid=(1,)) is the right tiling; callers pad the output dim to a
# multiple of 128 lanes so stores are unmasked.
# -----------------------------------------------------------------------------
def _matmul_bias_kernel(x_ref, w_ref, b_ref, o_ref):
    o_ref[...] = (
        jnp.dot(x_ref[...], w_ref[...], preferred_element_type=jnp.float32)
        + b_ref[...]
    ).astype(o_ref.dtype)


def matmul_bias(x, w, b):
    N, K = x.shape
    M = w.shape[1]
    return pl.pallas_call(
        _matmul_bias_kernel,
        out_shape=jax.ShapeDtypeStruct((N, M), jnp.float32),
        grid_spec=pltpu.PrefetchScalarGridSpec(
            num_scalar_prefetch=0,
            grid=(1,),
            in_specs=[
                pl.BlockSpec((N, K), lambda i: (0, 0)),
                pl.BlockSpec((K, M), lambda i: (0, 0)),
                pl.BlockSpec((1, M), lambda i: (0, 0)),
            ],
            out_specs=pl.BlockSpec((N, M), lambda i: (0, 0)),
        ),
        compiler_params=pltpu.CompilerParams(
            dimension_semantics=("arbitrary",)),
    )(x, w, b)


# -----------------------------------------------------------------------------
# Pallas kernel 2: fused bidirectional LSTM recurrence for one layer.
#   gx_ref : (T, B, 8*Hp)  precomputed x-projection + bias, gate-interleaved
#            columns [i_f,i_b, f_f,f_b, g_f,g_b, o_f,o_b]; the *_b half is
#            already time-reversed, so step s reads fwd(t=s) and bwd(t=T-1-s)
#            from a single row.
#   whh_ref: (2*Hp, 8*Hp)  block-diagonal recurrent weights, same column layout
#            (rows [0:Hp] = forward W_hh^T, rows [Hp:2Hp] = backward W_hh^T).
#   hf_ref : (T, B, Hp)    forward hidden states, time-aligned.
#   hb_ref : (T, B, Hp)    backward hidden states, time-aligned.
#   h_sc / c_sc : (B, 2*Hp) fused [fwd | bwd] recurrent state (VMEM resident).
# One (B, 2*Hp) x (2*Hp, 8*Hp) MXU push per step (lane width 8*Hp = 128).
# -----------------------------------------------------------------------------
def _bilstm_layer_kernel(gx_ref, whh_ref, hf_ref, hb_ref, h_sc, c_sc):
    T = gx_ref.shape[0]
    G = h_sc.shape[-1]          # 2*Hp == width of each fused gate slice
    Hp = G // 2

    h_sc[...] = jnp.zeros_like(h_sc)
    c_sc[...] = jnp.zeros_like(c_sc)

    # T is small and static -> fully unrolled (all indices static).
    for s in range(T):
        gates = gx_ref[s] + jnp.dot(
            h_sc[...], whh_ref[...], preferred_element_type=jnp.float32)  # (B, 8*Hp)
        i_g = jax.nn.sigmoid(gates[:, 0 * G:1 * G])
        f_g = jax.nn.sigmoid(gates[:, 1 * G:2 * G])
        g_g = jnp.tanh(gates[:, 2 * G:3 * G])
        o_g = jax.nn.sigmoid(gates[:, 3 * G:4 * G])

        c_new = f_g * c_sc[...] + i_g * g_g
        h_new = o_g * jnp.tanh(c_new)

        c_sc[...] = c_new
        h_sc[...] = h_new
        hf_ref[s] = h_new[:, :Hp]          # forward hidden at time s
        hb_ref[T - 1 - s] = h_new[:, Hp:]  # backward hidden at time T-1-s


def bilstm_layer(gx, whh_cat, Hp):
    T, B, G8 = gx.shape
    return pl.pallas_call(
        _bilstm_layer_kernel,
        out_shape=(
            jax.ShapeDtypeStruct((T, B, Hp), jnp.float32),
            jax.ShapeDtypeStruct((T, B, Hp), jnp.float32),
        ),
        grid_spec=pltpu.PrefetchScalarGridSpec(
            num_scalar_prefetch=0,
            grid=(1,),
            in_specs=[
                pl.BlockSpec((T, B, G8), lambda i: (0, 0, 0)),
                pl.BlockSpec(whh_cat.shape, lambda i: (0, 0)),
            ],
            out_specs=[
                pl.BlockSpec((T, B, Hp), lambda i: (0, 0, 0)),
                pl.BlockSpec((T, B, Hp), lambda i: (0, 0, 0)),
            ],
            scratch_shapes=[
                pltpu.VMEM((B, 2 * Hp), jnp.float32),  # h state [fwd | bwd]
                pltpu.VMEM((B, 2 * Hp), jnp.float32),  # c state [fwd | bwd]
            ],
        ),
        compiler_params=pltpu.CompilerParams(
            dimension_semantics=("arbitrary",)),  # serial recurrence
    )(gx, whh_cat)


# -----------------------------------------------------------------------------
# Parameter construction: PyTorch-style init, then pack/pad into the fused,
# lane-dense layouts the kernels expect. All zero-padding is value-preserving
# (padded hidden channels stay exactly 0 through the recurrence).
# -----------------------------------------------------------------------------
def _pad_gate_blocks(w, h, hp):
    """Pad last axis 4*h -> 4*hp, zero-padding each of the 4 gate blocks."""
    lead = w.shape[:-1]
    w4 = w.reshape(lead + (4, h))
    w4 = jnp.pad(w4, [(0, 0)] * len(lead) + [(0, 0), (0, hp - h)])
    return w4.reshape(lead + (4 * hp,))


def _pad_row_blocks(w, nblocks, h, hp):
    """Pad first axis nblocks*h -> nblocks*hp, zero-padding each block."""
    n = w.shape[-1]
    w3 = w.reshape(nblocks, h, n)
    w3 = jnp.pad(w3, ((0, 0), (0, hp - h), (0, 0)))
    return w3.reshape(nblocks * hp, n)


def _pack_lstm_layer(raw_f, raw_b, H, Hp, in_blocks):
    """raw_* = dict(wih=(4H,Din), whh=(4H,H), b=(4H,)) in PyTorch layout.

    in_blocks: number of H-sized blocks in the input dim (0 -> no row padding,
    i.e. the embedding input of layer 0; 2 -> [fwd H | bwd H] input of layer 1).
    """
    def prep_ih(raw):
        w = raw["wih"].T                                   # (Din, 4H)
        if in_blocks:
            w = _pad_row_blocks(w, in_blocks, H, Hp)       # (Din_p, 4H)
        return _pad_gate_blocks(w, H, Hp)                  # (Din_p, 4Hp)

    wih_both = jnp.concatenate([prep_ih(raw_f), prep_ih(raw_b)], axis=-1)  # (Din_p, 8Hp)
    b_both = jnp.concatenate(
        [_pad_gate_blocks(raw_f["b"], H, Hp), _pad_gate_blocks(raw_b["b"], H, Hp)]
    ).reshape(1, 8 * Hp)

    def prep_hh(raw):
        w = jnp.pad(raw["whh"].T, ((0, Hp - H), (0, 0)))   # (Hp, 4H)
        return _pad_gate_blocks(w, H, Hp).reshape(Hp, 4, Hp)

    whh_f = prep_hh(raw_f)
    whh_b = prep_hh(raw_b)
    z = jnp.zeros_like(whh_f)
    # Gate-interleaved block-diagonal: cols [i_f,i_b, f_f,f_b, g_f,g_b, o_f,o_b]
    whh_cat = jnp.concatenate([
        jnp.stack([whh_f, z], axis=2).reshape(Hp, 8 * Hp),
        jnp.stack([z, whh_b], axis=2).reshape(Hp, 8 * Hp),
    ], axis=0)                                             # (2Hp, 8Hp)

    return {"wih_both_t": wih_both, "b_both": b_both, "whh_cat": whh_cat}


def init_params(key, vocab_size, embedding_dim, hidden_dim, num_tags, pad_idx):
    H = hidden_dim // 2
    Hp = _round_up(H, 16)                 # 8*Hp is a multiple of 128 (lane-dense gates)
    nt_pad = _round_up(num_tags, 128)     # lane-dense hidden2tag output

    keys = jax.random.split(key, 32)
    kit = iter(keys)

    emb = jax.random.normal(next(kit), (vocab_size, embedding_dim), jnp.float32)
    emb = emb.at[pad_idx].set(0.0)

    def uni(k, shape, bound):
        return jax.random.uniform(k, shape, jnp.float32, -bound, bound)

    k_lstm = 1.0 / jnp.sqrt(H)
    layers = []
    for layer in range(2):
        din = embedding_dim if layer == 0 else hidden_dim
        raw = []
        for _direction in range(2):
            wih = uni(next(kit), (4 * H, din), k_lstm)   # PyTorch weight_ih: (4H, Din)
            whh = uni(next(kit), (4 * H, H), k_lstm)     # PyTorch weight_hh: (4H, H)
            bih = uni(next(kit), (4 * H,), k_lstm)
            bhh = uni(next(kit), (4 * H,), k_lstm)
            raw.append({"wih": wih, "whh": whh, "b": bih + bhh})
        layers.append(_pack_lstm_layer(raw[0], raw[1], H, Hp, 0 if layer == 0 else 2))

    k_lin = 1.0 / jnp.sqrt(hidden_dim)
    w_tag = uni(next(kit), (num_tags, hidden_dim), k_lin)   # PyTorch Linear: (out, in)
    b_tag = uni(next(kit), (num_tags,), k_lin)
    w_tag_t = _pad_row_blocks(w_tag.T, 2, H, Hp)             # (2Hp, num_tags)
    w_tag_t = jnp.pad(w_tag_t, ((0, 0), (0, nt_pad - num_tags)))
    b_tag_p = jnp.pad(b_tag, (0, nt_pad - num_tags)).reshape(1, nt_pad)

    return {"embedding": emb, "layers": layers,
            "tag_w_t": w_tag_t, "tag_b": b_tag_p}


# -----------------------------------------------------------------------------
# Forward
# -----------------------------------------------------------------------------
@functools.partial(jax.jit, static_argnames=("hidden_dim", "num_tags"))
def bilstm_crf_forward(params, sentence, hidden_dim, num_tags):
    """sentence: (B, T) int32 -> emissions: (B, T, num_tags) float32."""
    B, T = sentence.shape
    H = hidden_dim // 2
    Hp = _round_up(H, 16)
    Bp = _round_up(B, 8)                                     # full sublane tile

    # Embedding gather directly in time-major order; pad batch with token 0.
    tok = jnp.pad(jnp.transpose(sentence, (1, 0)), ((0, 0), (0, Bp - B)))
    x = jnp.take(params["embedding"], tok, axis=0)           # (T, Bp, E)

    for layer_p in params["layers"]:
        din = x.shape[-1]
        # (1) Hoisted input projection: one GEMM for all timesteps & both directions.
        g_all = matmul_bias(x.reshape(T * Bp, din),
                            layer_p["wih_both_t"], layer_p["b_both"])
        g_all = g_all.reshape(T, Bp, 2, 4, Hp)               # (T, Bp, dir, gate, Hp)
        # (2) Interleave fwd/bwd per gate and time-reverse the bwd half so the
        #     recurrent kernel reads one (Bp, 8Hp) row per step for both directions.
        gx = jnp.stack([g_all[:, :, 0], jnp.flip(g_all[:, :, 1], axis=0)],
                       axis=3).reshape(T, Bp, 8 * Hp)
        # (3) Fused bidirectional recurrence (single pallas_call per layer).
        h_f, h_b = bilstm_layer(gx, layer_p["whh_cat"], Hp)
        x = jnp.concatenate([h_f, h_b], axis=-1)             # (T, Bp, 2Hp), time-aligned
        # (inter-layer dropout omitted: eval-mode forward)

    # hidden2tag head (num_tags padded to 128 lanes inside the weights).
    emis = matmul_bias(x.reshape(T * Bp, 2 * Hp), params["tag_w_t"], params["tag_b"])
    emis = emis.reshape(T, Bp, -1)[:, :B, :num_tags]
    return jnp.transpose(emis, (1, 0, 2))                    # (B, T, num_tags)


if __name__ == "__main__":
    # Small synthetic config (mirrors the module's __init__ shapes).
    VOCAB_SIZE = 50
    EMBEDDING_DIM = 32
    HIDDEN_DIM = 32          # BiLSTM hidden per direction = 16
    NUM_TAGS = 8
    PAD_IDX = 0
    BATCH, SEQ = 2, 8

    key = jax.random.PRNGKey(0)
    k_params, k_data = jax.random.split(key)

    params = init_params(k_params, VOCAB_SIZE, EMBEDDING_DIM, HIDDEN_DIM,
                         NUM_TAGS, PAD_IDX)
    sentence = jax.random.randint(k_data, (BATCH, SEQ), 1, VOCAB_SIZE, dtype=jnp.int32)

    emissions = bilstm_crf_forward(params, sentence, HIDDEN_DIM, NUM_TAGS)
    emissions = jax.block_until_ready(emissions)

    assert emissions.shape == (BATCH, SEQ, NUM_TAGS)
    assert emissions.dtype == jnp.float32
    print("KERNEL_OK")
</pallas_src>

<mosaic_0001>
module attributes {stable_mosaic.version = 11 : i64} {
  func.func @_matmul_bias_kernel(%arg0: i32, %arg1: memref<64x32xf32, #tpu.memory_space<vmem>>, %arg2: memref<32x128xf32, #tpu.memory_space<vmem>>, %arg3: memref<1x128xf32, #tpu.memory_space<vmem>>, %arg4: memref<64x128xf32, #tpu.memory_space<vmem>>) attributes {dimension_semantics = [#tpu.dimension_semantics<arbitrary>], iteration_bounds = array<i64: 1>, scalar_prefetch = 0 : i64, scratch_operands = 0 : i64, tpu.core_type = #tpu.core_type<tc>, window_params = [{pipeline_mode = #tpu.pipeline_mode<synchronous>, transform_indices = @transform_0, window_bounds = array<i64: 64, 32>}, {pipeline_mode = #tpu.pipeline_mode<synchronous>, transform_indices = @transform_1, window_bounds = array<i64: 32, 128>}, {pipeline_mode = #tpu.pipeline_mode<synchronous>, transform_indices = @transform_2, window_bounds = array<i64: 1, 128>}, {pipeline_mode = #tpu.pipeline_mode<synchronous>, transform_indices = @transform_3, window_bounds = array<i64: 64, 128>}]} {
    %c0 = arith.constant 0 : index
    %c0_0 = arith.constant 0 : index
    %0 = vector.load %arg1[%c0, %c0_0] : memref<64x32xf32, #tpu.memory_space<vmem>>, vector<64x32xf32>
    %c0_1 = arith.constant 0 : index
    %c0_2 = arith.constant 0 : index
    %1 = vector.load %arg2[%c0_1, %c0_2] : memref<32x128xf32, #tpu.memory_space<vmem>>, vector<32x128xf32>
    %cst = arith.constant dense<0.000000e+00> : vector<64x128xf32>
    %2 = tpu.matmul %0, %1, %cst {dimension_numbers = #tpu.dot_dimension_numbers<[1], [0], [0], [1], [0, 0, 1, 1], [], []>} : vector<64x32xf32>, vector<32x128xf32>, vector<64x128xf32> -> vector<64x128xf32>
    %c0_3 = arith.constant 0 : index
    %c0_4 = arith.constant 0 : index
    %3 = vector.load %arg3[%c0_3, %c0_4] : memref<1x128xf32, #tpu.memory_space<vmem>>, vector<1x128xf32>
    %4 = vector.broadcast %3 : vector<1x128xf32> to vector<64x128xf32>
    %5 = arith.addf %2, %4 : vector<64x128xf32>
    %c0_5 = arith.constant 0 : index
    %c0_6 = arith.constant 0 : index
    %6 = vector.load %arg4[%c0_5, %c0_6] : memref<64x128xf32, #tpu.memory_space<vmem>>, vector<64x128xf32>
    tpu.vector_store %arg4[%c0_5, %c0_6], %5 {strides = array<i32>} : memref<64x128xf32, #tpu.memory_space<vmem>>, vector<64x128xf32>,
    return
  }
  func.func @transform_0(%arg0: i32) -> (i32, i32) {
    %c0_i32 = arith.constant 0 : i32
    %c0_i32_0 = arith.constant 0 : i32
    %c0_i32_1 = arith.constant 0 : i32
    return %c0_i32, %c0_i32_0 : i32, i32
  }
  func.func @transform_1(%arg0: i32) -> (i32, i32) {
    %c0_i32 = arith.constant 0 : i32
    %c0_i32_0 = arith.constant 0 : i32
    %c0_i32_1 = arith.constant 0 : i32
    return %c0_i32, %c0_i32_0 : i32, i32
  }
  func.func @transform_2(%arg0: i32) -> (i32, i32) {
    %c0_i32 = arith.constant 0 : i32
    %c0_i32_0 = arith.constant 0 : i32
    %c0_i32_1 = arith.constant 0 : i32
    return %c0_i32, %c0_i32_0 : i32, i32
  }
  func.func @transform_3(%arg0: i32) -> (i32, i32) {
    %c0_i32 = arith.constant 0 : i32
    %c0_i32_0 = arith.constant 0 : i32
    %c0_i32_1 = arith.constant 0 : i32
    return %c0_i32, %c0_i32_0 : i32, i32
  }
}

module attributes {stable_mosaic.version = 11 : i64} {
  func.func @_bilstm_layer_kernel(%arg0: i32, %arg1: memref<8x8x128xf32, #tpu.memory_space<vmem>>, %arg2: memref<32x128xf32, #tpu.memory_space<vmem>>, %arg3: memref<8x8x16xf32, #tpu.memory_space<vmem>>, %arg4: memref<8x8x16xf32, #tpu.memory_space<vmem>>, %arg5: memref<8x32xf32, #tpu.memory_space<vmem>>, %arg6: memref<8x32xf32, #tpu.memory_space<vmem>>) attributes {dimension_semantics = [#tpu.dimension_semantics<arbitrary>], iteration_bounds = array<i64: 1>, scalar_prefetch = 0 : i64, scratch_operands = 2 : i64, tpu.core_type = #tpu.core_type<tc>, window_params = [{pipeline_mode = #tpu.pipeline_mode<synchronous>, transform_indices = @transform_0, window_bounds = array<i64: 8, 8, 128>}, {pipeline_mode = #tpu.pipeline_mode<synchronous>, transform_indices = @transform_1, window_bounds = array<i64: 32, 128>}, {pipeline_mode = #tpu.pipeline_mode<synchronous>, transform_indices = @transform_2, window_bounds = array<i64: 8, 8, 16>}, {pipeline_mode = #tpu.pipeline_mode<synchronous>, transform_indices = @transform_3, window_bounds = array<i64: 8, 8, 16>}]} {
    %cst = arith.constant 0.000000e+00 : f32
    %0 = vector.broadcast %cst : f32 to vector<8x32xf32>
    %c0 = arith.constant 0 : index
    %c0_0 = arith.constant 0 : index
    %1 = vector.load %arg5[%c0, %c0_0] : memref<8x32xf32, #tpu.memory_space<vmem>>, vector<8x32xf32>
    tpu.vector_store %arg5[%c0, %c0_0], %0 {strides = array<i32>} : memref<8x32xf32, #tpu.memory_space<vmem>>, vector<8x32xf32>,
    %cst_1 = arith.constant 0.000000e+00 : f32
    %2 = vector.broadcast %cst_1 : f32 to vector<8x32xf32>
    %c0_2 = arith.constant 0 : index
    %c0_3 = arith.constant 0 : index
    %3 = vector.load %arg6[%c0_2, %c0_3] : memref<8x32xf32, #tpu.memory_space<vmem>>, vector<8x32xf32>
    tpu.vector_store %arg6[%c0_2, %c0_3], %2 {strides = array<i32>} : memref<8x32xf32, #tpu.memory_space<vmem>>, vector<8x32xf32>,
    %c0_4 = arith.constant 0 : index
    %c0_5 = arith.constant 0 : index
    %c0_6 = arith.constant 0 : index
    %4 = vector.load %arg1[%c0_4, %c0_5, %c0_6] : memref<8x8x128xf32, #tpu.memory_space<vmem>>, vector<1x8x128xf32>
    %5 = vector.shape_cast %4 : vector<1x8x128xf32> to vector<8x128xf32>
    %c0_7 = arith.constant 0 : index
    %c0_8 = arith.constant 0 : index
    %6 = vector.load %arg5[%c0_7, %c0_8] : memref<8x32xf32, #tpu.memory_space<vmem>>, vector<8x32xf32>
    %c0_9 = arith.constant 0 : index
    %c0_10 = arith.constant 0 : index
    %7 = vector.load %arg2[%c0_9, %c0_10] : memref<32x128xf32, #tpu.memory_space<vmem>>, vector<32x128xf32>
    %cst_11 = arith.constant dense<0.000000e+00> : vector<8x128xf32>
    %8 = tpu.matmul %6, %7, %cst_11 {dimension_numbers = #tpu.dot_dimension_numbers<[1], [0], [0], [1], [0, 0, 1, 1], [], []>} : vector<8x32xf32>, vector<32x128xf32>, vector<8x128xf32> -> vector<8x128xf32>
    %9 = arith.addf %5, %8 : vector<8x128xf32>
    %10 = vector.extract_strided_slice %9 {offsets = [0, 0], sizes = [8, 32], strides = [1, 1]} : vector<8x128xf32> to vector<8x32xf32>
    %11 = arith.negf %10 : vector<8x32xf32>
    %12 = math.exp %11 : vector<8x32xf32>
    %cst_12 = arith.constant 1.000000e+00 : f32
    %13 = vector.broadcast %cst_12 : f32 to vector<8x32xf32>
    %14 = arith.addf %13, %12 : vector<8x32xf32>
    %15 = arith.divf %13, %14 : vector<8x32xf32>
    %16 = vector.extract_strided_slice %9 {offsets = [0, 32], sizes = [8, 32], strides = [1, 1]} : vector<8x128xf32> to vector<8x32xf32>
    %17 = arith.negf %16 : vector<8x32xf32>
    %18 = math.exp %17 : vector<8x32xf32>
    %cst_13 = arith.constant 1.000000e+00 : f32
    %19 = vector.broadcast %cst_13 : f32 to vector<8x32xf32>
    %20 = arith.addf %19, %18 : vector<8x32xf32>
    %21 = arith.divf %19, %20 : vector<8x32xf32>
    %22 = vector.extract_strided_slice %9 {offsets = [0, 64], sizes = [8, 32], strides = [1, 1]} : vector<8x128xf32> to vector<8x32xf32>
    %23 = math.tanh %22 : vector<8x32xf32>
    %24 = vector.extract_strided_slice %9 {offsets = [0, 96], sizes = [8, 32], strides = [1, 1]} : vector<8x128xf32> to vector<8x32xf32>
    %25 = arith.negf %24 : vector<8x32xf32>
    %26 = math.exp %25 : vector<8x32xf32>
    %cst_14 = arith.constant 1.000000e+00 : f32
    %27 = vector.broadcast %cst_14 : f32 to vector<8x32xf32>
    %28 = arith.addf %27, %26 : vector<8x32xf32>
    %29 = arith.divf %27, %28 : vector<8x32xf32>
    %c0_15 = arith.constant 0 : index
    %c0_16 = arith.constant 0 : index
    %30 = vector.load %arg6[%c0_15, %c0_16] : memref<8x32xf32, #tpu.memory_space<vmem>>, vector<8x32xf32>
    %31 = arith.mulf %21, %30 : vector<8x32xf32>
    %32 = arith.mulf %15, %23 : vector<8x32xf32>
    %33 = arith.addf %31, %32 : vector<8x32xf32>
    %34 = math.tanh %33 : vector<8x32xf32>
    %35 = arith.mulf %29, %34 : vector<8x32xf32>
    %c0_17 = arith.constant 0 : index
    %c0_18 = arith.constant 0 : index
    %36 = vector.load %arg6[%c0_17, %c0_18] : memref<8x32xf32, #tpu.memory_space<vmem>>, vector<8x32xf32>
    tpu.vector_store %arg6[%c0_17, %c0_18], %33 {strides = array<i32>} : memref<8x32xf32, #tpu.memory_space<vmem>>, vector<8x32xf32>,
    %c0_19 = arith.constant 0 : index
    %c0_20 = arith.constant 0 : index
    %37 = vector.load %arg5[%c0_19, %c0_20] : memref<8x32xf32, #tpu.memory_space<vmem>>, vector<8x32xf32>
    tpu.vector_store %arg5[%c0_19, %c0_20], %35 {strides = array<i32>} : memref<8x32xf32, #tpu.memory_space<vmem>>, vector<8x32xf32>,
    %38 = vector.extract_strided_slice %35 {offsets = [0, 0], sizes = [8, 16], strides = [1, 1]} : vector<8x32xf32> to vector<8x16xf32>
    %c0_21 = arith.constant 0 : index
    %c0_22 = arith.constant 0 : index
    %c0_23 = arith.constant 0 : index
    %39 = vector.load %arg3[%c0_21, %c0_22, %c0_23] : memref<8x8x16xf32, #tpu.memory_space<vmem>>, vector<1x8x16xf32>
    %40 = vector.shape_cast %39 : vector<1x8x16xf32> to vector<8x16xf32>
    %41 = vector.shape_cast %38 : vector<8x16xf32> to vector<1x8x16xf32>
    tpu.vector_store %arg3[%c0_21, %c0_22, %c0_23], %41 {strides = array<i32>} : memref<8x8x16xf32, #tpu.memory_space<vmem>>, vector<1x8x16xf32>,
    %42 = vector.extract_strided_slice %35 {offsets = [0, 16], sizes = [8, 16], strides = [1, 1]} : vector<8x32xf32> to vector<8x16xf32>
    %c7 = arith.constant 7 : index
    %c0_24 = arith.constant 0 : index
    %c0_25 = arith.constant 0 : index
    %43 = vector.load %arg4[%c7, %c0_24, %c0_25] : memref<8x8x16xf32, #tpu.memory_space<vmem>>, vector<1x8x16xf32>
    %44 = vector.shape_cast %43 : vector<1x8x16xf32> to vector<8x16xf32>
    %45 = vector.shape_cast %42 : vector<8x16xf32> to vector<1x8x16xf32>
    tpu.vector_store %arg4[%c7, %c0_24, %c0_25], %45 {strides = array<i32>} : memref<8x8x16xf32, #tpu.memory_space<vmem>>, vector<1x8x16xf32>,
    %c1 = arith.constant 1 : index
    %c0_26 = arith.constant 0 : index
    %c0_27 = arith.constant 0 : index
    %46 = vector.load %arg1[%c1, %c0_26, %c0_27] : memref<8x8x128xf32, #tpu.memory_space<vmem>>, vector<1x8x128xf32>
    %47 = vector.shape_cast %46 : vector<1x8x128xf32> to vector<8x128xf32>
    %c0_28 = arith.constant 0 : index
    %c0_29 = arith.constant 0 : index
    %48 = vector.load %arg5[%c0_28, %c0_29] : memref<8x32xf32, #tpu.memory_space<vmem>>, vector<8x32xf32>
    %c0_30 = arith.constant 0 : index
    %c0_31 = arith.constant 0 : index
    %49 = vector.load %arg2[%c0_30, %c0_31] : memref<32x128xf32, #tpu.memory_space<vmem>>, vector<32x128xf32>
    %cst_32 = arith.constant dense<0.000000e+00> : vector<8x128xf32>
    %50 = tpu.matmul %48, %49, %cst_32 {dimension_numbers = #tpu.dot_dimension_numbers<[1], [0], [0], [1], [0, 0, 1, 1], [], []>} : vector<8x32xf32>, vector<32x128xf32>, vector<8x128xf32> -> vector<8x128xf32>
    %51 = arith.addf %47, %50 : vector<8x128xf32>
    %52 = vector.extract_strided_slice %51 {offsets = [0, 0], sizes = [8, 32], strides = [1, 1]} : vector<8x128xf32> to vector<8x32xf32>
    %53 = arith.negf %52 : vector<8x32xf32>
    %54 = math.exp %53 : vector<8x32xf32>
    %cst_33 = arith.constant 1.000000e+00 : f32
    %55 = vector.broadcast %cst_33 : f32 to vector<8x32xf32>
    %56 = arith.addf %55, %54 : vector<8x32xf32>
    %57 = arith.divf %55, %56 : vector<8x32xf32>
    %58 = vector.extract_strided_slice %51 {offsets = [0, 32], sizes = [8, 32], strides = [1, 1]} : vector<8x128xf32> to vector<8x32xf32>
    %59 = arith.negf %58 : vector<8x32xf32>
    %60 = math.exp %59 : vector<8x32xf32>
    %cst_34 = arith.constant 1.000000e+00 : f32
    %61 = vector.broadcast %cst_34 : f32 to vector<8x32xf32>
    %62 = arith.addf %61, %60 : vector<8x32xf32>
    %63 = arith.divf %61, %62 : vector<8x32xf32>
    %64 = vector.extract_strided_slice %51 {offsets = [0, 64], sizes = [8, 32], strides = [1, 1]} : vector<8x128xf32> to vector<8x32xf32>
    %65 = math.tanh %64 : vector<8x32xf32>
    %66 = vector.extract_strided_slice %51 {offsets = [0, 96], sizes = [8, 32], strides = [1, 1]} : vector<8x128xf32> to vector<8x32xf32>
    %67 = arith.negf %66 : vector<8x32xf32>
    %68 = math.exp %67 : vector<8x32xf32>
    %cst_35 = arith.constant 1.000000e+00 : f32
    %69 = vector.broadcast %cst_35 : f32 to vector<8x32xf32>
    %70 = arith.addf %69, %68 : vector<8x32xf32>
    %71 = arith.divf %69, %70 : vector<8x32xf32>
    %c0_36 = arith.constant 0 : index
    %c0_37 = arith.constant 0 : index
    %72 = vector.load %arg6[%c0_36, %c0_37] : memref<8x32xf32, #tpu.memory_space<vmem>>, vector<8x32xf32>
    %73 = arith.mulf %63, %72 : vector<8x32xf32>
    %74 = arith.mulf %57, %65 : vector<8x32xf32>
    %75 = arith.addf %73, %74 : vector<8x32xf32>
    %76 = math.tanh %75 : vector<8x32xf32>
    %77 = arith.mulf %71, %76 : vector<8x32xf32>
    %c0_38 = arith.constant 0 : index
    %c0_39 = arith.constant 0 : index
    %78 = vector.load %arg6[%c0_38, %c0_39] : memref<8x32xf32, #tpu.memory_space<vmem>>, vector<8x32xf32>
    tpu.vector_store %arg6[%c0_38, %c0_39], %75 {strides = array<i32>} : memref<8x32xf32, #tpu.memory_space<vmem>>, vector<8x32xf32>,
    %c0_40 = arith.constant 0 : index
    %c0_41 = arith.constant 0 : index
    %79 = vector.load %arg5[%c0_40, %c0_41] : memref<8x32xf32, #tpu.memory_space<vmem>>, vector<8x32xf32>
    tpu.vector_store %arg5[%c0_40, %c0_41], %77 {strides = array<i32>} : memref<8x32xf32, #tpu.memory_space<vmem>>, vector<8x32xf32>,
    %80 = vector.extract_strided_slice %77 {offsets = [0, 0], sizes = [8, 16], strides = [1, 1]} : vector<8x32xf32> to vector<8x16xf32>
    %c1_42 = arith.constant 1 : index
    %c0_43 = arith.constant 0 : index
    %c0_44 = arith.constant 0 : index
    %81 = vector.load %arg3[%c1_42, %c0_43, %c0_44] : memref<8x8x16xf32, #tpu.memory_space<vmem>>, vector<1x8x16xf32>
    %82 = vector.shape_cast %81 : vector<1x8x16xf32> to vector<8x16xf32>
    %83 = vector.shape_cast %80 : vector<8x16xf32> to vector<1x8x16xf32>
    tpu.vector_store %arg3[%c1_42, %c0_43, %c0_44], %83 {strides = array<i32>} : memref<8x8x16xf32, #tpu.memory_space<vmem>>, vector<1x8x16xf32>,
    %84 = vector.extract_strided_slice %77 {offsets = [0, 16], sizes = [8, 16], strides = [1, 1]} : vector<8x32xf32> to vector<8x16xf32>
    %c6 = arith.constant 6 : index
    %c0_45 = arith.constant 0 : index
    %c0_46 = arith.constant 0 : index
    %85 = vector.load %arg4[%c6, %c0_45, %c0_46] : memref<8x8x16xf32, #tpu.memory_space<vmem>>, vector<1x8x16xf32>
    %86 = vector.shape_cast %85 : vector<1x8x16xf32> to vector<8x16xf32>
    %87 = vector.shape_cast %84 : vector<8x16xf32> to vector<1x8x16xf32>
    tpu.vector_store %arg4[%c6, %c0_45, %c0_46], %87 {strides = array<i32>} : memref<8x8x16xf32, #tpu.memory_space<vmem>>, vector<1x8x16xf32>,
    %c2 = arith.constant 2 : index
    %c0_47 = arith.constant 0 : index
    %c0_48 = arith.constant 0 : index
    %88 = vector.load %arg1[%c2, %c0_47, %c0_48] : memref<8x8x128xf32, #tpu.memory_space<vmem>>, vector<1x8x128xf32>
    %89 = vector.shape_cast %88 : vector<1x8x128xf32> to vector<8x128xf32>
    %c0_49 = arith.constant 0 : index
    %c0_50 = arith.constant 0 : index
    %90 = vector.load %arg5[%c0_49, %c0_50] : memref<8x32xf32, #tpu.memory_space<vmem>>, vector<8x32xf32>
    %c0_51 = arith.constant 0 : index
    %c0_52 = arith.constant 0 : index
    %91 = vector.load %arg2[%c0_51, %c0_52] : memref<32x128xf32, #tpu.memory_space<vmem>>, vector<32x128xf32>
    %cst_53 = arith.constant dense<0.000000e+00> : vector<8x128xf32>
    %92 = tpu.matmul %90, %91, %cst_53 {dimension_numbers = #tpu.dot_dimension_numbers<[1], [0], [0], [1], [0, 0, 1, 1], [], []>} : vector<8x32xf32>, vector<32x128xf32>, vector<8x128xf32> -> vector<8x128xf32>
    %93 = arith.addf %89, %92 : vector<8x128xf32>
    %94 = vector.extract_strided_slice %93 {offsets = [0, 0], sizes = [8, 32], strides = [1, 1]} : vector<8x128xf32> to vector<8x32xf32>
    %95 = arith.negf %94 : vector<8x32xf32>
    %96 = math.exp %95 : vector<8x32xf32>
    %cst_54 = arith.constant 1.000000e+00 : f32
    %97 = vector.broadcast %cst_54 : f32 to vector<8x32xf32>
    %98 = arith.addf %97, %96 : vector<8x32xf32>
    %99 = arith.divf %97, %98 : vector<8x32xf32>
    %100 = vector.extract_strided_slice %93 {offsets = [0, 32], sizes = [8, 32], strides = [1, 1]} : vector<8x128xf32> to vector<8x32xf32>
    %101 = arith.negf %100 : vector<8x32xf32>
    %102 = math.exp %101 : vector<8x32xf32>
    %cst_55 = arith.constant 1.000000e+00 : f32
    %103 = vector.broadcast %cst_55 : f32 to vector<8x32xf32>
    %104 = arith.addf %103, %102 : vector<8x32xf32>
    %105 = arith.divf %103, %104 : vector<8x32xf32>
    %106 = vector.extract_strided_slice %93 {offsets = [0, 64], sizes = [8, 32], strides = [1, 1]} : vector<8x128xf32> to vector<8x32xf32>
    %107 = math.tanh %106 : vector<8x32xf32>
    %108 = vector.extract_strided_slice %93 {offsets = [0, 96], sizes = [8, 32], strides = [1, 1]} : vector<8x128xf32> to vector<8x32xf32>
    %109 = arith.negf %108 : vector<8x32xf32>
    %110 = math.exp %109 : vector<8x32xf32>
    %cst_56 = arith.constant 1.000000e+00 : f32
    %111 = vector.broadcast %cst_56 : f32 to vector<8x32xf32>
    %112 = arith.addf %111, %110 : vector<8x32xf32>
    %113 = arith.divf %111, %112 : vector<8x32xf32>
    %c0_57 = arith.constant 0 : index
    %c0_58 = arith.constant 0 : index
    %114 = vector.load %arg6[%c0_57, %c0_58] : memref<8x32xf32, #tpu.memory_space<vmem>>, vector<8x32xf32>
    %115 = arith.mulf %105, %114 : vector<8x32xf32>
    %116 = arith.mulf %99, %107 : vector<8x32xf32>
    %117 = arith.addf %115, %116 : vector<8x32xf32>
    %118 = math.tanh %117 : vector<8x32xf32>
    %119 = arith.mulf %113, %118 : vector<8x32xf32>
    %c0_59 = arith.constant 0 : index
    %c0_60 = arith.constant 0 : index
    %120 = vector.load %arg6[%c0_59, %c0_60] : memref<8x32xf32, #tpu.memory_space<vmem>>, vector<8x32xf32>
    tpu.vector_store %arg6[%c0_59, %c0_60], %117 {strides = array<i32>} : memref<8x32xf32, #tpu.memory_space<vmem>>, vector<8x32xf32>,
    %c0_61 = arith.constant 0 : index
    %c0_62 = arith.constant 0 : index
    %121 = vector.load %arg5[%c0_61, %c0_62] : memref<8x32xf32, #tpu.memory_space<vmem>>, vector<8x32xf32>
    tpu.vector_store %arg5[%c0_61, %c0_62], %119 {strides = array<i32>} : memref<8x32xf32, #tpu.memory_space<vmem>>, vector<8x32xf32>,
    %122 = vector.extract_strided_slice %119 {offsets = [0, 0], sizes = [8, 16], strides = [1, 1]} : vector<8x32xf32> to vector<8x16xf32>
    %c2_63 = arith.constant 2 : index
    %c0_64 = arith.constant 0 : index
    %c0_65 = arith.constant 0 : index
    %123 = vector.load %arg3[%c2_63, %c0_64, %c0_65] : memref<8x8x16xf32, #tpu.memory_space<vmem>>, vector<1x8x16xf32>
    %124 = vector.shape_cast %123 : vector<1x8x16xf32> to vector<8x16xf32>
    %125 = vector.shape_cast %122 : vector<8x16xf32> to vector<1x8x16xf32>
    tpu.vector_store %arg3[%c2_63, %c0_64, %c0_65], %125 {strides = array<i32>} : memref<8x8x16xf32, #tpu.memory_space<vmem>>, vector<1x8x16xf32>,
    %126 = vector.extract_strided_slice %119 {offsets = [0, 16], sizes = [8, 16], strides = [1, 1]} : vector<8x32xf32> to vector<8x16xf32>
    %c5 = arith.constant 5 : index
    %c0_66 = arith.constant 0 : index
    %c0_67 = arith.constant 0 : index
    %127 = vector.load %arg4[%c5, %c0_66, %c0_67] : memref<8x8x16xf32, #tpu.memory_space<vmem>>, vector<1x8x16xf32>
    %128 = vector.shape_cast %127 : vector<1x8x16xf32> to vector<8x16xf32>
    %129 = vector.shape_cast %126 : vector<8x16xf32> to vector<1x8x16xf32>
    tpu.vector_store %arg4[%c5, %c0_66, %c0_67], %129 {strides = array<i32>} : memref<8x8x16xf32, #tpu.memory_space<vmem>>, vector<1x8x16xf32>,
    %c3 = arith.constant 3 : index
    %c0_68 = arith.constant 0 : index
    %c0_69 = arith.constant 0 : index
    %130 = vector.load %arg1[%c3, %c0_68, %c0_69] : memref<8x8x128xf32, #tpu.memory_space<vmem>>, vector<1x8x128xf32>
    %131 = vector.shape_cast %130 : vector<1x8x128xf32> to vector<8x128xf32>
    %c0_70 = arith.constant 0 : index
    %c0_71 = arith.constant 0 : index
    %132 = vector.load %arg5[%c0_70, %c0_71] : memref<8x32xf32, #tpu.memory_space<vmem>>, vector<8x32xf32>
    %c0_72 = arith.constant 0 : index
    %c0_73 = arith.constant 0 : index
    %133 = vector.load %arg2[%c0_72, %c0_73] : memref<32x128xf32, #tpu.memory_space<vmem>>, vector<32x128xf32>
    %cst_74 = arith.constant dense<0.000000e+00> : vector<8x128xf32>
    %134 = tpu.matmul %132, %133, %cst_74 {dimension_numbers = #tpu.dot_dimension_numbers<[1], [0], [0], [1], [0, 0, 1, 1], [], []>} : vector<8x32xf32>, vector<32x128xf32>, vector<8x128xf32> -> vector<8x128xf32>
    %135 = arith.addf %131, %134 : vector<8x128xf32>
    %136 = vector.extract_strided_slice %135 {offsets = [0, 0], sizes = [8, 32], strides = [1, 1]} : vector<8x128xf32> to vector<8x32xf32>
    %137 = arith.negf %136 : vector<8x32xf32>
    %138 = math.exp %137 : vector<8x32xf32>
    %cst_75 = arith.constant 1.000000e+00 : f32
    %139 = vector.broadcast %cst_75 : f32 to vector<8x32xf32>
    %140 = arith.addf %139, %138 : vector<8x32xf32>
    %141 = arith.divf %139, %140 : vector<8x32xf32>
    %142 = vector.extract_strided_slice %135 {offsets = [0, 32], sizes = [8, 32], strides = [1, 1]} : vector<8x128xf32> to vector<8x32xf32>
    %143 = arith.negf %142 : vector<8x32xf32>
    %144 = math.exp %143 : vector<8x32xf32>
    %cst_76 = arith.constant 1.000000e+00 : f32
    %145 = vector.broadcast %cst_76 : f32 to vector<8x32xf32>
    %146 = arith.addf %145, %144 : vector<8x32xf32>
    %147 = arith.divf %145, %146 : vector<8x32xf32>
    %148 = vector.extract_strided_slice %135 {offsets = [0, 64], sizes = [8, 32], strides = [1, 1]} : vector<8x128xf32> to vector<8x32xf32>
    %149 = math.tanh %148 : vector<8x32xf32>
    %150 = vector.extract_strided_slice %135 {offsets = [0, 96], sizes = [8, 32], strides = [1, 1]} : vector<8x128xf32> to vector<8x32xf32>
    %151 = arith.negf %150 : vector<8x32xf32>
    %152 = math.exp %151 : vector<8x32xf32>
    %cst_77 = arith.constant 1.000000e+00 : f32
    %153 = vector.broadcast %cst_77 : f32 to vector<8x32xf32>
    %154 = arith.addf %153, %152 : vector<8x32xf32>
    %155 = arith.divf %153, %154 : vector<8x32xf32>
    %c0_78 = arith.constant 0 : index
    %c0_79 = arith.constant 0 : index
    %156 = vector.load %arg6[%c0_78, %c0_79] : memref<8x32xf32, #tpu.memory_space<vmem>>, vector<8x32xf32>
    %157 = arith.mulf %147, %156 : vector<8x32xf32>
    %158 = arith.mulf %141, %149 : vector<8x32xf32>
    %159 = arith.addf %157, %158 : vector<8x32xf32>
    %160 = math.tanh %159 : vector<8x32xf32>
    %161 = arith.mulf %155, %160 : vector<8x32xf32>
    %c0_80 = arith.constant 0 : index
    %c0_81 = arith.constant 0 : index
    %162 = vector.load %arg6[%c0_80, %c0_81] : memref<8x32xf32, #tpu.memory_space<vmem>>, vector<8x32xf32>
    tpu.vector_store %arg6[%c0_80, %c0_81], %159 {strides = array<i32>} : memref<8x32xf32, #tpu.memory_space<vmem>>, vector<8x32xf32>,
    %c0_82 = arith.constant 0 : index
    %c0_83 = arith.constant 0 : index
    %163 = vector.load %arg5[%c0_82, %c0_83] : memref<8x32xf32, #tpu.memory_space<vmem>>, vector<8x32xf32>
    tpu.vector_store %arg5[%c0_82, %c0_83], %161 {strides = array<i32>} : memref<8x32xf32, #tpu.memory_space<vmem>>, vector<8x32xf32>,
    %164 = vector.extract_strided_slice %161 {offsets = [0, 0], sizes = [8, 16], strides = [1, 1]} : vector<8x32xf32> to vector<8x16xf32>
    %c3_84 = arith.constant 3 : index
    %c0_85 = arith.constant 0 : index
    %c0_86 = arith.constant 0 : index
    %165 = vector.load %arg3[%c3_84, %c0_85, %c0_86] : memref<8x8x16xf32, #tpu.memory_space<vmem>>, vector<1x8x16xf32>
    %166 = vector.shape_cast %165 : vector<1x8x16xf32> to vector<8x16xf32>
    %167 = vector.shape_cast %164 : vector<8x16xf32> to vector<1x8x16xf32>
    tpu.vector_store %arg3[%c3_84, %c0_85, %c0_86], %167 {strides = array<i32>} : memref<8x8x16xf32, #tpu.memory_space<vmem>>, vector<1x8x16xf32>,
    %168 = vector.extract_strided_slice %161 {offsets = [0, 16], sizes = [8, 16], strides = [1, 1]} : vector<8x32xf32> to vector<8x16xf32>
    %c4 = arith.constant 4 : index
    %c0_87 = arith.constant 0 : index
    %c0_88 = arith.constant 0 : index
    %169 = vector.load %arg4[%c4, %c0_87, %c0_88] : memref<8x8x16xf32, #tpu.memory_space<vmem>>, vector<1x8x16xf32>
    %170 = vector.shape_cast %169 : vector<1x8x16xf32> to vector<8x16xf32>
    %171 = vector.shape_cast %168 : vector<8x16xf32> to vector<1x8x16xf32>
    tpu.vector_store %arg4[%c4, %c0_87, %c0_88], %171 {strides = array<i32>} : memref<8x8x16xf32, #tpu.memory_space<vmem>>, vector<1x8x16xf32>,
    %c4_89 = arith.constant 4 : index
    %c0_90 = arith.constant 0 : index
    %c0_91 = arith.constant 0 : index
    %172 = vector.load %arg1[%c4_89, %c0_90, %c0_91] : memref<8x8x128xf32, #tpu.memory_space<vmem>>, vector<1x8x128xf32>
    %173 = vector.shape_cast %172 : vector<1x8x128xf32> to vector<8x128xf32>
    %c0_92 = arith.constant 0 : index
    %c0_93 = arith.constant 0 : index
    %174 = vector.load %arg5[%c0_92, %c0_93] : memref<8x32xf32, #tpu.memory_space<vmem>>, vector<8x32xf32>
    %c0_94 = arith.constant 0 : index
    %c0_95 = arith.constant 0 : index
    %175 = vector.load %arg2[%c0_94, %c0_95] : memref<32x128xf32, #tpu.memory_space<vmem>>, vector<32x128xf32>
    %cst_96 = arith.constant dense<0.000000e+00> : vector<8x128xf32>
    %176 = tpu.matmul %174, %175, %cst_96 {dimension_numbers = #tpu.dot_dimension_numbers<[1], [0], [0], [1], [0, 0, 1, 1], [], []>} : vector<8x32xf32>, vector<32x128xf32>, vector<8x128xf32> -> vector<8x128xf32>
    %177 = arith.addf %173, %176 : vector<8x128xf32>
    %178 = vector.extract_strided_slice %177 {offsets = [0, 0], sizes = [8, 32], strides = [1, 1]} : vector<8x128xf32> to vector<8x32xf32>
    %179 = arith.negf %178 : vector<8x32xf32>
    %180 = math.exp %179 : vector<8x32xf32>
    %cst_97 = arith.constant 1.000000e+00 : f32
    %181 = vector.broadcast %cst_97 : f32 to vector<8x32xf32>
    %182 = arith.addf %181, %180 : vector<8x32xf32>
    %183 = arith.divf %181, %182 : vector<8x32xf32>
    %184 = vector.extract_strided_slice %177 {offsets = [0, 32], sizes = [8, 32], strides = [1, 1]} : vector<8x128xf32> to vector<8x32xf32>
    %185 = arith.negf %184 : vector<8x32xf32>
    %186 = math.exp %185 : vector<8x32xf32>
    %cst_98 = arith.constant 1.000000e+00 : f32
    %187 = vector.broadcast %cst_98 : f32 to vector<8x32xf32>
    %188 = arith.addf %187, %186 : vector<8x32xf32>
    %189 = arith.divf %187, %188 : vector<8x32xf32>
    %190 = vector.extract_strided_slice %177 {offsets = [0, 64], sizes = [8, 32], strides = [1, 1]} : vector<8x128xf32> to vector<8x32xf32>
    %191 = math.tanh %190 : vector<8x32xf32>
    %192 = vector.extract_strided_slice %177 {offsets = [0, 96], sizes = [8, 32], strides = [1, 1]} : vector<8x128xf32> to vector<8x32xf32>
    %193 = arith.negf %192 : vector<8x32xf32>
    %194 = math.exp %193 : vector<8x32xf32>
    %cst_99 = arith.constant 1.000000e+00 : f32
    %195 = vector.broadcast %cst_99 : f32 to vector<8x32xf32>
    %196 = arith.addf %195, %194 : vector<8x32xf32>
    %197 = arith.divf %195, %196 : vector<8x32xf32>
    %c0_100 = arith.constant 0 : index
    %c0_101 = arith.constant 0 : index
    %198 = vector.load %arg6[%c0_100, %c0_101] : memref<8x32xf32, #tpu.memory_space<vmem>>, vector<8x32xf32>
    %199 = arith.mulf %189, %198 : vector<8x32xf32>
    %200 = arith.mulf %183, %191 : vector<8x32xf32>
    %201 = arith.addf %199, %200 : vector<8x32xf32>
    %202 = math.tanh %201 : vector<8x32xf32>
    %203 = arith.mulf %197, %202 : vector<8x32xf32>
    %c0_102 = arith.constant 0 : index
    %c0_103 = arith.constant 0 : index
    %204 = vector.load %arg6[%c0_102, %c0_103] : memref<8x32xf32, #tpu.memory_space<vmem>>, vector<8x32xf32>
    tpu.vector_store %arg6[%c0_102, %c0_103], %201 {strides = array<i32>} : memref<8x32xf32, #tpu.memory_space<vmem>>, vector<8x32xf32>,
    %c0_104 = arith.constant 0 : index
    %c0_105 = arith.constant 0 : index
    %205 = vector.load %arg5[%c0_104, %c0_105] : memref<8x32xf32, #tpu.memory_space<vmem>>, vector<8x32xf32>
    tpu.vector_store %arg5[%c0_104, %c0_105], %203 {strides = array<i32>} : memref<8x32xf32, #tpu.memory_space<vmem>>, vector<8x32xf32>,
    %206 = vector.extract_strided_slice %203 {offsets = [0, 0], sizes = [8, 16], strides = [1, 1]} : vector<8x32xf32> to vector<8x16xf32>
    %c4_106 = arith.constant 4 : index
    %c0_107 = arith.constant 0 : index
    %c0_108 = arith.constant 0 : index
    %207 = vector.load %arg3[%c4_106, %c0_107, %c0_108] : memref<8x8x16xf32, #tpu.memory_space<vmem>>, vector<1x8x16xf32>
    %208 = vector.shape_cast %207 : vector<1x8x16xf32> to vector<8x16xf32>
    %209 = vector.shape_cast %206 : vector<8x16xf32> to vector<1x8x16xf32>
    tpu.vector_store %arg3[%c4_106, %c0_107, %c0_108], %209 {strides = array<i32>} : memref<8x8x16xf32, #tpu.memory_space<vmem>>, vector<1x8x16xf32>,
    %210 = vector.extract_strided_slice %203 {offsets = [0, 16], sizes = [8, 16], strides = [1, 1]} : vector<8x32xf32> to vector<8x16xf32>
    %c3_109 = arith.constant 3 : index
    %c0_110 = arith.constant 0 : index
    %c0_111 = arith.constant 0 : index
    %211 = vector.load %arg4[%c3_109, %c0_110, %c0_111] : memref<8x8x16xf32, #tpu.memory_space<vmem>>, vector<1x8x16xf32>
    %212 = vector.shape_cast %211 : vector<1x8x16xf32> to vector<8x16xf32>
    %213 = vector.shape_cast %210 : vector<8x16xf32> to vector<1x8x16xf32>
    tpu.vector_store %arg4[%c3_109, %c0_110, %c0_111], %213 {strides = array<i32>} : memref<8x8x16xf32, #tpu.memory_space<vmem>>, vector<1x8x16xf32>,
    %c5_112 = arith.constant 5 : index
    %c0_113 = arith.constant 0 : index
    %c0_114 = arith.constant 0 : index
    %214 = vector.load %arg1[%c5_112, %c0_113, %c0_114] : memref<8x8x128xf32, #tpu.memory_space<vmem>>, vector<1x8x128xf32>
    %215 = vector.shape_cast %214 : vector<1x8x128xf32> to vector<8x128xf32>
    %c0_115 = arith.constant 0 : index
    %c0_116 = arith.constant 0 : index
    %216 = vector.load %arg5[%c0_115, %c0_116] : memref<8x32xf32, #tpu.memory_space<vmem>>, vector<8x32xf32>
    %c0_117 = arith.constant 0 : index
    %c0_118 = arith.constant 0 : index
    %217 = vector.load %arg2[%c0_117, %c0_118] : memref<32x128xf32, #tpu.memory_space<vmem>>, vector<32x128xf32>
    %cst_119 = arith.constant dense<0.000000e+00> : vector<8x128xf32>
    %218 = tpu.matmul %216, %217, %cst_119 {dimension_numbers = #tpu.dot_dimension_numbers<[1], [0], [0], [1], [0, 0, 1, 1], [], []>} : vector<8x32xf32>, vector<32x128xf32>, vector<8x128xf32> -> vector<8x128xf32>
    %219 = arith.addf %215, %218 : vector<8x128xf32>
    %220 = vector.extract_strided_slice %219 {offsets = [0, 0], sizes = [8, 32], strides = [1, 1]} : vector<8x128xf32> to vector<8x32xf32>
    %221 = arith.negf %220 : vector<8x32xf32>
    %222 = math.exp %221 : vector<8x32xf32>
    %cst_120 = arith.constant 1.000000e+00 : f32
    %223 = vector.broadcast %cst_120 : f32 to vector<8x32xf32>
    %224 = arith.addf %223, %222 : vector<8x32xf32>
    %225 = arith.divf %223, %224 : vector<8x32xf32>
    %226 = vector.extract_strided_slice %219 {offsets = [0, 32], sizes = [8, 32], strides = [1, 1]} : vector<8x128xf32> to vector<8x32xf32>
    %227 = arith.negf %226 : vector<8x32xf32>
    %228 = math.exp %227 : vector<8x32xf32>
    %cst_121 = arith.constant 1.000000e+00 : f32
    %229 = vector.broadcast %cst_121 : f32 to vector<8x32xf32>
    %230 = arith.addf %229, %228 : vector<8x32xf32>
    %231 = arith.divf %229, %230 : vector<8x32xf32>
    %232 = vector.extract_strided_slice %219 {offsets = [0, 64], sizes = [8, 32], strides = [1, 1]} : vector<8x128xf32> to vector<8x32xf32>
    %233 = math.tanh %232 : vector<8x32xf32>
    %234 = vector.extract_strided_slice %219 {offsets = [0, 96], sizes = [8, 32], strides = [1, 1]} : vector<8x128xf32> to vector<8x32xf32>
    %235 = arith.negf %234 : vector<8x32xf32>
    %236 = math.exp %235 : vector<8x32xf32>
    %cst_122 = arith.constant 1.000000e+00 : f32
    %237 = vector.broadcast %cst_122 : f32 to vector<8x32xf32>
    %238 = arith.addf %237, %236 : vector<8x32xf32>
    %239 = arith.divf %237, %238 : vector<8x32xf32>
    %c0_123 = arith.constant 0 : index
    %c0_124 = arith.constant 0 : index
    %240 = vector.load %arg6[%c0_123, %c0_124] : memref<8x32xf32, #tpu.memory_space<vmem>>, vector<8x32xf32>
    %241 = arith.mulf %231, %240 : vector<8x32xf32>
    %242 = arith.mulf %225, %233 : vector<8x32xf32>
    %243 = arith.addf %241, %242 : vector<8x32xf32>
    %244 = math.tanh %243 : vector<8x32xf32>
    %245 = arith.mulf %239, %244 : vector<8x32xf32>
    %c0_125 = arith.constant 0 : index
    %c0_126 = arith.constant 0 : index
    %246 = vector.load %arg6[%c0_125, %c0_126] : memref<8x32xf32, #tpu.memory_space<vmem>>, vector<8x32xf32>
    tpu.vector_store %arg6[%c0_125, %c0_126], %243 {strides = array<i32>} : memref<8x32xf32, #tpu.memory_space<vmem>>, vector<8x32xf32>,
    %c0_127 = arith.constant 0 : index
    %c0_128 = arith.constant 0 : index
    %247 = vector.load %arg5[%c0_127, %c0_128] : memref<8x32xf32, #tpu.memory_space<vmem>>, vector<8x32xf32>
    tpu.vector_store %arg5[%c0_127, %c0_128], %245 {strides = array<i32>} : memref<8x32xf32, #tpu.memory_space<vmem>>, vector<8x32xf32>,
    %248 = vector.extract_strided_slice %245 {offsets = [0, 0], sizes = [8, 16], strides = [1, 1]} : vector<8x32xf32> to vector<8x16xf32>
    %c5_129 = arith.constant 5 : index
    %c0_130 = arith.constant 0 : index
    %c0_131 = arith.constant 0 : index
    %249 = vector.load %arg3[%c5_129, %c0_130, %c0_131] : memref<8x8x16xf32, #tpu.memory_space<vmem>>, vector<1x8x16xf32>
    %250 = vector.shape_cast %249 : vector<1x8x16xf32> to vector<8x16xf32>
    %251 = vector.shape_cast %248 : vector<8x16xf32> to vector<1x8x16xf32>
    tpu.vector_store %arg3[%c5_129, %c0_130, %c0_131], %251 {strides = array<i32>} : memref<8x8x16xf32, #tpu.memory_space<vmem>>, vector<1x8x16xf32>,
    %252 = vector.extract_strided_slice %245 {offsets = [0, 16], sizes = [8, 16], strides = [1, 1]} : vector<8x32xf32> to vector<8x16xf32>
    %c2_132 = arith.constant 2 : index
    %c0_133 = arith.constant 0 : index
    %c0_134 = arith.constant 0 : index
    %253 = vector.load %arg4[%c2_132, %c0_133, %c0_134] : memref<8x8x16xf32, #tpu.memory_space<vmem>>, vector<1x8x16xf32>
    %254 = vector.shape_cast %253 : vector<1x8x16xf32> to vector<8x16xf32>
    %255 = vector.shape_cast %252 : vector<8x16xf32> to vector<1x8x16xf32>
    tpu.vector_store %arg4[%c2_132, %c0_133, %c0_134], %255 {strides = array<i32>} : memref<8x8x16xf32, #tpu.memory_space<vmem>>, vector<1x8x16xf32>,
    %c6_135 = arith.constant 6 : index
    %c0_136 = arith.constant 0 : index
    %c0_137 = arith.constant 0 : index
    %256 = vector.load %arg1[%c6_135, %c0_136, %c0_137] : memref<8x8x128xf32, #tpu.memory_space<vmem>>, vector<1x8x128xf32>
    %257 = vector.shape_cast %256 : vector<1x8x128xf32> to vector<8x128xf32>
    %c0_138 = arith.constant 0 : index
    %c0_139 = arith.constant 0 : index
    %258 = vector.load %arg5[%c0_138, %c0_139] : memref<8x32xf32, #tpu.memory_space<vmem>>, vector<8x32xf32>
    %c0_140 = arith.constant 0 : index
    %c0_141 = arith.constant 0 : index
    %259 = vector.load %arg2[%c0_140, %c0_141] : memref<32x128xf32, #tpu.memory_space<vmem>>, vector<32x128xf32>
    %cst_142 = arith.constant dense<0.000000e+00> : vector<8x128xf32>
    %260 = tpu.matmul %258, %259, %cst_142 {dimension_numbers = #tpu.dot_dimension_numbers<[1], [0], [0], [1], [0, 0, 1, 1], [], []>} : vector<8x32xf32>, vector<32x128xf32>, vector<8x128xf32> -> vector<8x128xf32>
    %261 = arith.addf %257, %260 : vector<8x128xf32>
    %262 = vector.extract_strided_slice %261 {offsets = [0, 0], sizes = [8, 32], strides = [1, 1]} : vector<8x128xf32> to vector<8x32xf32>
    %263 = arith.negf %262 : vector<8x32xf32>
    %264 = math.exp %263 : vector<8x32xf32>
    %cst_143 = arith.constant 1.000000e+00 : f32
    %265 = vector.broadcast %cst_143 : f32 to vector<8x32xf32>
    %266 = arith.addf %265, %264 : vector<8x32xf32>
    %267 = arith.divf %265, %266 : vector<8x32xf32>
    %268 = vector.extract_strided_slice %261 {offsets = [0, 32], sizes = [8, 32], strides = [1, 1]} : vector<8x128xf32> to vector<8x32xf32>
    %269 = arith.negf %268 : vector<8x32xf32>
    %270 = math.exp %269 : vector<8x32xf32>
    %cst_144 = arith.constant 1.000000e+00 : f32
    %271 = vector.broadcast %cst_144 : f32 to vector<8x32xf32>
    %272 = arith.addf %271, %270 : vector<8x32xf32>
    %273 = arith.divf %271, %272 : vector<8x32xf32>
    %274 = vector.extract_strided_slice %261 {offsets = [0, 64], sizes = [8, 32], strides = [1, 1]} : vector<8x128xf32> to vector<8x32xf32>
    %275 = math.tanh %274 : vector<8x32xf32>
    %276 = vector.extract_strided_slice %261 {offsets = [0, 96], sizes = [8, 32], strides = [1, 1]} : vector<8x128xf32> to vector<8x32xf32>
    %277 = arith.negf %276 : vector<8x32xf32>
    %278 = math.exp %277 : vector<8x32xf32>
    %cst_145 = arith.constant 1.000000e+00 : f32
    %279 = vector.broadcast %cst_145 : f32 to vector<8x32xf32>
    %280 = arith.addf %279, %278 : vector<8x32xf32>
    %281 = arith.divf %279, %280 : vector<8x32xf32>
    %c0_146 = arith.constant 0 : index
    %c0_147 = arith.constant 0 : index
    %282 = vector.load %arg6[%c0_146, %c0_147] : memref<8x32xf32, #tpu.memory_space<vmem>>, vector<8x32xf32>
    %283 = arith.mulf %273, %282 : vector<8x32xf32>
    %284 = arith.mulf %267, %275 : vector<8x32xf32>
    %285 = arith.addf %283, %284 : vector<8x32xf32>
    %286 = math.tanh %285 : vector<8x32xf32>
    %287 = arith.mulf %281, %286 : vector<8x32xf32>
    %c0_148 = arith.constant 0 : index
    %c0_149 = arith.constant 0 : index
    %288 = vector.load %arg6[%c0_148, %c0_149] : memref<8x32xf32, #tpu.memory_space<vmem>>, vector<8x32xf32>
    tpu.vector_store %arg6[%c0_148, %c0_149], %285 {strides = array<i32>} : memref<8x32xf32, #tpu.memory_space<vmem>>, vector<8x32xf32>,
    %c0_150 = arith.constant 0 : index
    %c0_151 = arith.constant 0 : index
    %289 = vector.load %arg5[%c0_150, %c0_151] : memref<8x32xf32, #tpu.memory_space<vmem>>, vector<8x32xf32>
    tpu.vector_store %arg5[%c0_150, %c0_151], %287 {strides = array<i32>} : memref<8x32xf32, #tpu.memory_space<vmem>>, vector<8x32xf32>,
    %290 = vector.extract_strided_slice %287 {offsets = [0, 0], sizes = [8, 16], strides = [1, 1]} : vector<8x32xf32> to vector<8x16xf32>
    %c6_152 = arith.constant 6 : index
    %c0_153 = arith.constant 0 : index
    %c0_154 = arith.constant 0 : index
    %291 = vector.load %arg3[%c6_152, %c0_153, %c0_154] : memref<8x8x16xf32, #tpu.memory_space<vmem>>, vector<1x8x16xf32>
    %292 = vector.shape_cast %291 : vector<1x8x16xf32> to vector<8x16xf32>
    %293 = vector.shape_cast %290 : vector<8x16xf32> to vector<1x8x16xf32>
    tpu.vector_store %arg3[%c6_152, %c0_153, %c0_154], %293 {strides = array<i32>} : memref<8x8x16xf32, #tpu.memory_space<vmem>>, vector<1x8x16xf32>,
    %294 = vector.extract_strided_slice %287 {offsets = [0, 16], sizes = [8, 16], strides = [1, 1]} : vector<8x32xf32> to vector<8x16xf32>
    %c1_155 = arith.constant 1 : index
    %c0_156 = arith.constant 0 : index
    %c0_157 = arith.constant 0 : index
    %295 = vector.load %arg4[%c1_155, %c0_156, %c0_157] : memref<8x8x16xf32, #tpu.memory_space<vmem>>, vector<1x8x16xf32>
    %296 = vector.shape_cast %295 : vector<1x8x16xf32> to vector<8x16xf32>
    %297 = vector.shape_cast %294 : vector<8x16xf32> to vector<1x8x16xf32>
    tpu.vector_store %arg4[%c1_155, %c0_156, %c0_157], %297 {strides = array<i32>} : memref<8x8x16xf32, #tpu.memory_space<vmem>>, vector<1x8x16xf32>,
    %c7_158 = arith.constant 7 : index
    %c0_159 = arith.constant 0 : index
    %c0_160 = arith.constant 0 : index
    %298 = vector.load %arg1[%c7_158, %c0_159, %c0_160] : memref<8x8x128xf32, #tpu.memory_space<vmem>>, vector<1x8x128xf32>
    %299 = vector.shape_cast %298 : vector<1x8x128xf32> to vector<8x128xf32>
    %c0_161 = arith.constant 0 : index
    %c0_162 = arith.constant 0 : index
    %300 = vector.load %arg5[%c0_161, %c0_162] : memref<8x32xf32, #tpu.memory_space<vmem>>, vector<8x32xf32>
    %c0_163 = arith.constant 0 : index
    %c0_164 = arith.constant 0 : index
    %301 = vector.load %arg2[%c0_163, %c0_164] : memref<32x128xf32, #tpu.memory_space<vmem>>, vector<32x128xf32>
    %cst_165 = arith.constant dense<0.000000e+00> : vector<8x128xf32>
    %302 = tpu.matmul %300, %301, %cst_165 {dimension_numbers = #tpu.dot_dimension_numbers<[1], [0], [0], [1], [0, 0, 1, 1], [], []>} : vector<8x32xf32>, vector<32x128xf32>, vector<8x128xf32> -> vector<8x128xf32>
    %303 = arith.addf %299, %302 : vector<8x128xf32>
    %304 = vector.extract_strided_slice %303 {offsets = [0, 0], sizes = [8, 32], strides = [1, 1]} : vector<8x128xf32> to vector<8x32xf32>
    %305 = arith.negf %304 : vector<8x32xf32>
    %306 = math.exp %305 : vector<8x32xf32>
    %cst_166 = arith.constant 1.000000e+00 : f32
    %307 = vector.broadcast %cst_166 : f32 to vector<8x32xf32>
    %308 = arith.addf %307, %306 : vector<8x32xf32>
    %309 = arith.divf %307, %308 : vector<8x32xf32>
    %310 = vector.extract_strided_slice %303 {offsets = [0, 32], sizes = [8, 32], strides = [1, 1]} : vector<8x128xf32> to vector<8x32xf32>
    %311 = arith.negf %310 : vector<8x32xf32>
    %312 = math.exp %311 : vector<8x32xf32>
    %cst_167 = arith.constant 1.000000e+00 : f32
    %313 = vector.broadcast %cst_167 : f32 to vector<8x32xf32>
    %314 = arith.addf %313, %312 : vector<8x32xf32>
    %315 = arith.divf %313, %314 : vector<8x32xf32>
    %316 = vector.extract_strided_slice %303 {offsets = [0, 64], sizes = [8, 32], strides = [1, 1]} : vector<8x128xf32> to vector<8x32xf32>
    %317 = math.tanh %316 : vector<8x32xf32>
    %318 = vector.extract_strided_slice %303 {offsets = [0, 96], sizes = [8, 32], strides = [1, 1]} : vector<8x128xf32> to vector<8x32xf32>
    %319 = arith.negf %318 : vector<8x32xf32>
    %320 = math.exp %319 : vector<8x32xf32>
    %cst_168 = arith.constant 1.000000e+00 : f32
    %321 = vector.broadcast %cst_168 : f32 to vector<8x32xf32>
    %322 = arith.addf %321, %320 : vector<8x32xf32>
    %323 = arith.divf %321, %322 : vector<8x32xf32>
    %c0_169 = arith.constant 0 : index
    %c0_170 = arith.constant 0 : index
    %324 = vector.load %arg6[%c0_169, %c0_170] : memref<8x32xf32, #tpu.memory_space<vmem>>, vector<8x32xf32>
    %325 = arith.mulf %315, %324 : vector<8x32xf32>
    %326 = arith.mulf %309, %317 : vector<8x32xf32>
    %327 = arith.addf %325, %326 : vector<8x32xf32>
    %328 = math.tanh %327 : vector<8x32xf32>
    %329 = arith.mulf %323, %328 : vector<8x32xf32>
    %c0_171 = arith.constant 0 : index
    %c0_172 = arith.constant 0 : index
    %330 = vector.load %arg6[%c0_171, %c0_172] : memref<8x32xf32, #tpu.memory_space<vmem>>, vector<8x32xf32>
    tpu.vector_store %arg6[%c0_171, %c0_172], %327 {strides = array<i32>} : memref<8x32xf32, #tpu.memory_space<vmem>>, vector<8x32xf32>,
    %c0_173 = arith.constant 0 : index
    %c0_174 = arith.constant 0 : index
    %331 = vector.load %arg5[%c0_173, %c0_174] : memref<8x32xf32, #tpu.memory_space<vmem>>, vector<8x32xf32>
    tpu.vector_store %arg5[%c0_173, %c0_174], %329 {strides = array<i32>} : memref<8x32xf32, #tpu.memory_space<vmem>>, vector<8x32xf32>,
    %332 = vector.extract_strided_slice %329 {offsets = [0, 0], sizes = [8, 16], strides = [1, 1]} : vector<8x32xf32> to vector<8x16xf32>
    %c7_175 = arith.constant 7 : index
    %c0_176 = arith.constant 0 : index
    %c0_177 = arith.constant 0 : index
    %333 = vector.load %arg3[%c7_175, %c0_176, %c0_177] : memref<8x8x16xf32, #tpu.memory_space<vmem>>, vector<1x8x16xf32>
    %334 = vector.shape_cast %333 : vector<1x8x16xf32> to vector<8x16xf32>
    %335 = vector.shape_cast %332 : vector<8x16xf32> to vector<1x8x16xf32>
    tpu.vector_store %arg3[%c7_175, %c0_176, %c0_177], %335 {strides = array<i32>} : memref<8x8x16xf32, #tpu.memory_space<vmem>>, vector<1x8x16xf32>,
    %336 = vector.extract_strided_slice %329 {offsets = [0, 16], sizes = [8, 16], strides = [1, 1]} : vector<8x32xf32> to vector<8x16xf32>
    %c0_178 = arith.constant 0 : index
    %c0_179 = arith.constant 0 : index
    %c0_180 = arith.constant 0 : index
    %337 = vector.load %arg4[%c0_178, %c0_179, %c0_180] : memref<8x8x16xf32, #tpu.memory_space<vmem>>, vector<1x8x16xf32>
    %338 = vector.shape_cast %337 : vector<1x8x16xf32> to vector<8x16xf32>
    %339 = vector.shape_cast %336 : vector<8x16xf32> to vector<1x8x16xf32>
    tpu.vector_store %arg4[%c0_178, %c0_179, %c0_180], %339 {strides = array<i32>} : memref<8x8x16xf32, #tpu.memory_space<vmem>>, vector<1x8x16xf32>,
    return
  }
  func.func @transform_0(%arg0: i32) -> (i32, i32, i32) {
    %c0_i32 = arith.constant 0 : i32
    %c0_i32_0 = arith.constant 0 : i32
    %c0_i32_1 = arith.constant 0 : i32
    %c0_i32_2 = arith.constant 0 : i32
    return %c0_i32, %c0_i32_0, %c0_i32_1 : i32, i32, i32
  }
  func.func @transform_1(%arg0: i32) -> (i32, i32) {
    %c0_i32 = arith.constant 0 : i32
    %c0_i32_0 = arith.constant 0 : i32
    %c0_i32_1 = arith.constant 0 : i32
    return %c0_i32, %c0_i32_0 : i32, i32
  }
  func.func @transform_2(%arg0: i32) -> (i32, i32, i32) {
    %c0_i32 = arith.constant 0 : i32
    %c0_i32_0 = arith.constant 0 : i32
    %c0_i32_1 = arith.constant 0 : i32
    %c0_i32_2 = arith.constant 0 : i32
    return %c0_i32, %c0_i32_0, %c0_i32_1 : i32, i32, i32
  }
  func.func @transform_3(%arg0: i32) -> (i32, i32, i32) {
    %c0_i32 = arith.constant 0 : i32
    %c0_i32_0 = arith.constant 0 : i32
    %c0_i32_1 = arith.constant 0 : i32
    %c0_i32_2 = arith.constant 0 : i32
    return %c0_i32, %c0_i32_0, %c0_i32_1 : i32, i32, i32
  }
}

</mosaic_0001>

<llo_original>
// kernel: bilstm_crf_forward.5
$region0: #{bilstm_crf_forward.5}
  #allocation0 [shape = 'u32[]', space=smem, size = 0x4, offset = 0x4, fixed_abs, tag = 'smem constant byte address 0x4 - core index']
  #allocation1 [shape = 'u32[144,128]{1,0:T(1,128)}', space=vmem, size = 0x12000, scoped, tag = 'internal scratch']
  %s0 = inlined_call_operand.vmem [shape: f32[64,32], index: 0, kind: input, shape index: {}]
  %s1 = inlined_call_operand.vmem [shape: f32[32,128], index: 1, kind: input, shape index: {}]
  %s2 = inlined_call_operand.vmem [shape: f32[1,128], index: 2, kind: input, shape index: {}]
  %s3 = inlined_call_operand.vmem [shape: f32[64,128], index: 3, kind: output, shape index: {}]
  %s4 = sld [smem:[#allocation0]]
  $region22: #{bilstm_crf_forward.5} parent=0
    _
  %s6 = ssub.s32 1, %s4
  %s7 = scalar_select 0, %s6, %s4
  // Predicated region
  $region2: #{bilstm_crf_forward.5} parent=0 // pred_check
    _
  $region3: #{bilstm_crf_forward.5} parent=0 // pred_check_branch
    %9 = sbr.rel (0) target = $region5
  $region4: #{bilstm_crf_forward.5} parent=0 // pred_region
    _
  $region5: #{bilstm_crf_forward.5} parent=0 // pred_fallthru
    _
  // Predicated region
  $region6: #{bilstm_crf_forward.5} parent=0 // pred_check
    _
  $region7: #{bilstm_crf_forward.5} parent=0 // pred_check_branch
    %11 = sbr.rel (0) target = $region9
  $region8: #{bilstm_crf_forward.5} parent=0 // pred_region
    _
  $region9: #{bilstm_crf_forward.5} parent=0 // pred_fallthru
    _
  // Predicated region
  $region10: #{bilstm_crf_forward.5} parent=0 // pred_check
    _
  $region11: #{bilstm_crf_forward.5} parent=0 // pred_check_branch
    %13 = sbr.rel (0) target = $region13
  $region12: #{bilstm_crf_forward.5} parent=0 // pred_region
    _
  $region13: #{bilstm_crf_forward.5} parent=0 // pred_fallthru
    _
  %v14 = vld [vmem:[%s0] sm:$0xff]
  %v15 = vld [vmem:[%s0 + $0x8] sm:$0xff]
  %v16 = vld [vmem:[%s0 + $0x10] sm:$0xff]
  %v17 = vld [vmem:[%s0 + $0x18] sm:$0xff]
  %v18 = vld [vmem:[%s0 + $0x20] sm:$0xff]
  %v19 = vld [vmem:[%s0 + $0x28] sm:$0xff]
  %v20 = vld [vmem:[%s0 + $0x30] sm:$0xff]
  %v21 = vld [vmem:[%s0 + $0x38] sm:$0xff]
  %v22 = vld [vmem:[%s1] sm:$0xff]
  %v23 = vld [vmem:[%s1 + $0x8] sm:$0xff]
  %v24 = vld [vmem:[%s1 + $0x10] sm:$0xff]
  %v25 = vld [vmem:[%s1 + $0x18] sm:$0xff]
  %v26 = vld [vmem:[%s2] sm:$0x1]
  %v28 = vlaneseq
  %v29 = vshrl.u32 %v28, 7
  %v30 = vsub.s32 0, %v29
  %v31 = vrot.slane %v26, %v30
  %vm33 = vcmask 261120
  %v35 = vsel %vm33, %v14, 0
  %v38 = vsel %vm33, %v15, 0
  %v41 = vsel %vm33, %v16, 0
  %v44 = vsel %vm33, %v17, 0
  %v47 = vsel %vm33, %v18, 0
  %v50 = vsel %vm33, %v19, 0
  %v53 = vsel %vm33, %v20, 0
  %v56 = vsel %vm33, %v21, 0
  %58 = vmatprep.subr.mxu0 0.0
  %59 = vmatpush1.msra.mxu0 0.0
  %60 = vmatprep.subr.mxu0 0.0
  %61 = vmatpush1.msra.mxu0 0.0
  %62 = vmatprep.subr.mxu0 0.0
  %63 = vmatpush1.msra.mxu0 0.0
  %64 = vmatprep.subr.mxu0 0.0
  %65 = vmatpush1.msra.mxu0 0.0
  %66 = vmatprep.subr.mxu0 0.0
  %67 = vmatpush1.msra.mxu0 0.0
  %68 = vmatprep.subr.mxu0 0.0
  %69 = vmatpush1.msra.mxu0 0.0
  %70 = vmatprep.subr.mxu0 0.0
  %71 = vmatpush1.msra.mxu0 0.0
  %72 = vmatprep.subr.mxu0 0.0
  %73 = vmatpush1.msra.mxu0 0.0
  %74 = vmatprep.subr.mxu0 0.0
  %75 = vmatpush1.msra.mxu0 0.0
  %76 = vmatprep.subr.mxu0 0.0
  %77 = vmatpush1.msra.mxu0 0.0
  %78 = vmatprep.subr.mxu0 0.0
  %79 = vmatpush1.msra.mxu0 0.0
  %80 = vmatprep.subr.mxu0 0.0
  %81 = vmatpush1.msra.mxu0 0.0
  %82 = vmatprep.subr.mxu0 0.0
  %83 = vmatpush1.msra.mxu0 %v25
  %84 = vmatprep.subr.mxu0 0.0
  %85 = vmatpush1.msra.mxu0 %v24
  %86 = vmatprep.subr.mxu0 0.0
  %87 = vmatpush1.msra.mxu0 %v23
  %88 = vmatprep.subr.mxu0 0.0
  %89 = vmatpush1.msra.mxu0 %v22
  %90 = vmatprep.subr.mxu0 0.0
  %91 = vmatpush2.msra.mxu0 0.0
  %92 = vmatprep.subr.mxu0 0.0
  %93 = vmatpush2.msra.mxu0 0.0
  %94 = vmatprep.subr.mxu0 0.0
  %95 = vmatpush2.msra.mxu0 0.0
  %96 = vmatprep.subr.mxu0 0.0
  %97 = vmatpush2.msra.mxu0 0.0
  %98 = vmatprep.subr.mxu0 0.0
  %99 = vmatpush2.msra.mxu0 0.0
  %100 = vmatprep.subr.mxu0 0.0
  %101 = vmatpush2.msra.mxu0 0.0
  %102 = vmatprep.subr.mxu0 0.0
  %103 = vmatpush2.msra.mxu0 0.0
  %104 = vmatprep.subr.mxu0 0.0
  %105 = vmatpush2.msra.mxu0 0.0
  %106 = vmatprep.subr.mxu0 0.0
  %107 = vmatpush2.msra.mxu0 0.0
  %108 = vmatprep.subr.mxu0 0.0
  %109 = vmatpush2.msra.mxu0 0.0
  %110 = vmatprep.subr.mxu0 0.0
  %111 = vmatpush2.msra.mxu0 0.0
  %112 = vmatprep.subr.mxu0 0.0
  %113 = vmatpush2.msra.mxu0 0.0
  %114 = vmatprep.subr.mxu0 0.0
  %115 = vmatpush2.msra.mxu0 0.0
  %116 = vmatprep.subr.mxu0 0.0
  %117 = vmatpush2.msra.mxu0 0.0
  %118 = vmatprep.subr.mxu0 0.0
  %119 = vmatpush2.msra.mxu0 0.0
  %120 = vmatprep.subr.mxu0 0.0
  %121 = vmatpush2.msra.mxu0 0.0
  %122 = vmatprep.mubr.f32.mxu0 0.0
  %123 = vmatmul.mubr.f32.gmra.mxu0 %v35
  %v124 = vpop.f32.mrf.mxu0
  %v125 = vadd.f32 %v31, %v124
  %v126 = vpop.f32.mrf.mxu0
  %127 = vmatprep.mubr.f32.mxu0 0.0
  %128 = vmatmul.mubr.f32.gmra.mxu0 %v38
  %v129 = vpop.f32.mrf.mxu0
  %v130 = vadd.f32 %v31, %v129
  %v131 = vpop.f32.mrf.mxu0
  %132 = vmatprep.mubr.f32.mxu0 0.0
  %133 = vmatmul.mubr.f32.gmra.mxu0 %v41
  %v134 = vpop.f32.mrf.mxu0
  %v135 = vadd.f32 %v31, %v134
  %v136 = vpop.f32.mrf.mxu0
  %137 = vmatprep.mubr.f32.mxu0 0.0
  %138 = vmatmul.mubr.f32.gmra.mxu0 %v44
  %v139 = vpop.f32.mrf.mxu0
  %v140 = vadd.f32 %v31, %v139
  %v141 = vpop.f32.mrf.mxu0
  %142 = vmatprep.mubr.f32.mxu0 0.0
  %143 = vmatmul.mubr.f32.gmra.mxu0 %v47
  %v144 = vpop.f32.mrf.mxu0
  %v145 = vadd.f32 %v31, %v144
  %v146 = vpop.f32.mrf.mxu0
  %147 = vmatprep.mubr.f32.mxu0 0.0
  %148 = vmatmul.mubr.f32.gmra.mxu0 %v50
  %v149 = vpop.f32.mrf.mxu0
  %v150 = vadd.f32 %v31, %v149
  %v151 = vpop.f32.mrf.mxu0
  %152 = vmatprep.mubr.f32.mxu0 0.0
  %153 = vmatmul.mubr.f32.gmra.mxu0 %v53
  %v154 = vpop.f32.mrf.mxu0
  %v155 = vadd.f32 %v31, %v154
  %v156 = vpop.f32.mrf.mxu0
  %157 = vmatprep.mubr.f32.mxu0 0.0
  %158 = vmatmul.mubr.f32.gmra.mxu0 %v56
  %v159 = vpop.f32.mrf.mxu0
  %v160 = vadd.f32 %v31, %v159
  %v161 = vpop.f32.mrf.mxu0
  %162 = vdwg.mxu0
  %163 = vst [vmem:[%s3] sm:$0xff] %v125
  %164 = vst [vmem:[%s3 + $0x8] sm:$0xff] %v130
  %165 = vst [vmem:[%s3 + $0x10] sm:$0xff] %v135
  %166 = vst [vmem:[%s3 + $0x18] sm:$0xff] %v140
  %167 = vst [vmem:[%s3 + $0x20] sm:$0xff] %v145
  %168 = vst [vmem:[%s3 + $0x28] sm:$0xff] %v150
  %169 = vst [vmem:[%s3 + $0x30] sm:$0xff] %v155
  %170 = vst [vmem:[%s3 + $0x38] sm:$0xff] %v160
  // Predicated region
  $region14: #{bilstm_crf_forward.5} parent=0 // pred_check
    _
  $region15: #{bilstm_crf_forward.5} parent=0 // pred_check_branch
    %172 = sbr.rel (0) target = $region17
  $region16: #{bilstm_crf_forward.5} parent=0 // pred_region
    _
  $region17: #{bilstm_crf_forward.5} parent=0 // pred_fallthru
    _
  // Predicated region
  $region18: #{bilstm_crf_forward.5} parent=0 // pred_check
    _
  $region19: #{bilstm_crf_forward.5} parent=0 // pred_check_branch
    %174 = sbr.rel (0) target = $region21
  $region20: #{bilstm_crf_forward.5} parent=0 // pred_region
    _
  $region21: #{bilstm_crf_forward.5} parent=0 // pred_fallthru
    _

// kernel: bilstm_crf_forward.6
$region0: #{bilstm_crf_forward.6}
  #allocation0 [shape = 'u32[]', space=smem, size = 0x4, offset = 0x4, fixed_abs, tag = 'smem constant byte address 0x4 - core index']
  #allocation1 [shape = 'u32[144,128]{1,0:T(1,128)}', space=vmem, size = 0x12000, scoped, tag = 'internal scratch']
  #allocation2 [shape = 'f32[8,32]{1,0:T(8,128)}', space=vmem, size = 0x1000, scoped, tag = 'scratch operand']
  #allocation3 [shape = 'f32[8,32]{1,0:T(8,128)}', space=vmem, size = 0x1000, scoped, tag = 'scratch operand']
  %s0 = inlined_call_operand.vmem [shape: f32[8,8,128], index: 0, kind: input, shape index: {}]
  %s1 = inlined_call_operand.vmem [shape: f32[32,128], index: 1, kind: input, shape index: {}]
  %s2 = inlined_call_operand.vmem [shape: f32[8,8,16], index: 2, kind: output, shape index: {0}]
  %s3 = inlined_call_operand.vmem [shape: f32[8,8,16], index: 3, kind: output, shape index: {1}]
  %4 = xla_tuple %s2, %s3
  %s5 = sld [smem:[#allocation0]]
  $region26: #{bilstm_crf_forward.6} parent=0
    _
  %s7 = ssub.s32 1, %s5
  %s8 = scalar_select 0, %s7, %s5
  // Predicated region
  $region2: #{bilstm_crf_forward.6} parent=0 // pred_check
    _
  $region3: #{bilstm_crf_forward.6} parent=0 // pred_check_branch
    %10 = sbr.rel (0) target = $region5
  $region4: #{bilstm_crf_forward.6} parent=0 // pred_region
    _
  $region5: #{bilstm_crf_forward.6} parent=0 // pred_fallthru
    _
  // Predicated region
  $region6: #{bilstm_crf_forward.6} parent=0 // pred_check
    _
  $region7: #{bilstm_crf_forward.6} parent=0 // pred_check_branch
    %12 = sbr.rel (0) target = $region9
  $region8: #{bilstm_crf_forward.6} parent=0 // pred_region
    _
  $region9: #{bilstm_crf_forward.6} parent=0 // pred_fallthru
    _
  %vm13 = vcmask 261120
  %14 = vst.msk [vmem:[#allocation2] sm:$0xff] %vm13, 0.0
  %15 = vst.msk [vmem:[#allocation3] sm:$0xff] %vm13, 0.0
  %v16 = vld [vmem:[%s0] sm:$0xff]
  %v17 = vld [vmem:[#allocation2] sm:$0xff]
  %v18 = vld [vmem:[%s1] sm:$0xff]
  %v19 = vld [vmem:[%s1 + $0x8] sm:$0xff]
  %v20 = vld [vmem:[%s1 + $0x10] sm:$0xff]
  %v21 = vld [vmem:[%s1 + $0x18] sm:$0xff]
  %v23 = vsel %vm13, %v17, 0
  %25 = vmatprep.subr.mxu0 0.0
  %26 = vmatpush1.msra.mxu0 0.0
  %27 = vmatprep.subr.mxu0 0.0
  %28 = vmatpush1.msra.mxu0 0.0
  %29 = vmatprep.subr.mxu0 0.0
  %30 = vmatpush1.msra.mxu0 0.0
  %31 = vmatprep.subr.mxu0 0.0
  %32 = vmatpush1.msra.mxu0 0.0
  %33 = vmatprep.subr.mxu0 0.0
  %34 = vmatpush1.msra.mxu0 0.0
  %35 = vmatprep.subr.mxu0 0.0
  %36 = vmatpush1.msra.mxu0 0.0
  %37 = vmatprep.subr.mxu0 0.0
  %38 = vmatpush1.msra.mxu0 0.0
  %39 = vmatprep.subr.mxu0 0.0
  %40 = vmatpush1.msra.mxu0 0.0
  %41 = vmatprep.subr.mxu0 0.0
  %42 = vmatpush1.msra.mxu0 0.0
  %43 = vmatprep.subr.mxu0 0.0
  %44 = vmatpush1.msra.mxu0 0.0
  %45 = vmatprep.subr.mxu0 0.0
  %46 = vmatpush1.msra.mxu0 0.0
  %47 = vmatprep.subr.mxu0 0.0
  %48 = vmatpush1.msra.mxu0 0.0
  %49 = vmatprep.subr.mxu0 0.0
  %50 = vmatpush1.msra.mxu0 %v21
  %51 = vmatprep.subr.mxu0 0.0
  %52 = vmatpush1.msra.mxu0 %v20
  %53 = vmatprep.subr.mxu0 0.0
  %54 = vmatpush1.msra.mxu0 %v19
  %55 = vmatprep.subr.mxu0 0.0
  %56 = vmatpush1.msra.mxu0 %v18
  %57 = vmatprep.subr.mxu0 0.0
  %58 = vmatpush2.msra.mxu0 0.0
  %59 = vmatprep.subr.mxu0 0.0
  %60 = vmatpush2.msra.mxu0 0.0
  %61 = vmatprep.subr.mxu0 0.0
  %62 = vmatpush2.msra.mxu0 0.0
  %63 = vmatprep.subr.mxu0 0.0
  %64 = vmatpush2.msra.mxu0 0.0
  %65 = vmatprep.subr.mxu0 0.0
  %66 = vmatpush2.msra.mxu0 0.0
  %67 = vmatprep.subr.mxu0 0.0
  %68 = vmatpush2.msra.mxu0 0.0
  %69 = vmatprep.subr.mxu0 0.0
  %70 = vmatpush2.msra.mxu0 0.0
  %71 = vmatprep.subr.mxu0 0.0
  %72 = vmatpush2.msra.mxu0 0.0
  %73 = vmatprep.subr.mxu0 0.0
  %74 = vmatpush2.msra.mxu0 0.0
  %75 = vmatprep.subr.mxu0 0.0
  %76 = vmatpush2.msra.mxu0 0.0
  %77 = vmatprep.subr.mxu0 0.0
  %78 = vmatpush2.msra.mxu0 0.0
  %79 = vmatprep.subr.mxu0 0.0
  %80 = vmatpush2.msra.mxu0 0.0
  %81 = vmatprep.subr.mxu0 0.0
  %82 = vmatpush2.msra.mxu0 0.0
  %83 = vmatprep.subr.mxu0 0.0
  %84 = vmatpush2.msra.mxu0 0.0
  %85 = vmatprep.subr.mxu0 0.0
  %86 = vmatpush2.msra.mxu0 0.0
  %87 = vmatprep.subr.mxu0 0.0
  %88 = vmatpush2.msra.mxu0 0.0
  %89 = vmatprep.mubr.f32.mxu0 0.0
  %90 = vmatmul.mubr.f32.gmra.mxu0 %v23
  %v91 = vpop.f32.mrf.mxu0
  %v92 = vadd.f32 0.0, %v91
  %v93 = vpop.f32.mrf.mxu0
  %94 = vdwg.mxu0
  %v95 = vadd.f32 %v16, %v92
  %v96 = vxor.u32 %v95, 2147483648
  %v97 = vmul.f32 %v96, 1.442695
  %v98 = vpow.pop %v97
  %v99 = vadd.f32 %v98, 1.0
  %v100 = vrcp.pop %v99
  %v101 = vmul.f32 1.0, %v100
  %v102 = vtanh.pop %v95
  %v103 = vld [vmem:[#allocation3] sm:$0xff]
  %105 = vrot.lane.b32.xlu0 %v103, 32
  %v106 = vpop.permute.xlu0 %105
  %v108 = vmul.f32 %v101, %v106
  %110 = vrot.lane.b32.xlu0 %v102, 64
  %v111 = vpop.permute.xlu0 %110
  %v113 = vmul.f32 %v101, %v111
  %115 = vrot.lane.b32.xlu0 %v113, 32
  %v116 = vpop.permute.xlu0 %115
  %v118 = vadd.f32 %v108, %v116
  %v119 = vtanh.pop %v118
  %121 = vrot.lane.b32.xlu0 %v119, 64
  %v122 = vpop.permute.xlu0 %121
  %v124 = vmul.f32 %v101, %v122
  %126 = vrot.lane.b32.xlu0 %v118, 96
  %v127 = vpop.permute.xlu0 %126
  %129 = vst.msk [vmem:[#allocation3] sm:$0xff] %vm13, %v127
  %131 = vrot.lane.b32.xlu0 %v124, 32
  %v132 = vpop.permute.xlu0 %131
  %134 = vst.msk [vmem:[#allocation2] sm:$0xff] %vm13, %v132
  %vm135 = vcmask 130048
  %136 = vst.msk [vmem:[%s2] sm:$0xff] %vm135, %v132
  %137 = vrot.lane.b32.xlu0 %v124, 16
  %v138 = vpop.permute.xlu0 %137
  %s140 = scalar_lea.vmem %s3, 56
  %141 = vst.msk [vmem:[%s140] sm:$0xff] %vm135, %v138
  %s142 = scalar_lea.vmem %s0, 8
  %v143 = vld [vmem:[%s142] sm:$0xff]
  %v144 = vld [vmem:[#allocation2] sm:$0xff]
  %v145 = vld [vmem:[%s1] sm:$0xff]
  %v146 = vld [vmem:[%s1 + $0x8] sm:$0xff]
  %v147 = vld [vmem:[%s1 + $0x10] sm:$0xff]
  %v148 = vld [vmem:[%s1 + $0x18] sm:$0xff]
  %v150 = vsel %vm13, %v144, 0
  %152 = vmatprep.subr.mxu0 0.0
  %153 = vmatpush1.msra.mxu0 0.0
  %154 = vmatprep.subr.mxu0 0.0
  %155 = vmatpush1.msra.mxu0 0.0
  %156 = vmatprep.subr.mxu0 0.0
  %157 = vmatpush1.msra.mxu0 0.0
  %158 = vmatprep.subr.mxu0 0.0
  %159 = vmatpush1.msra.mxu0 0.0
  %160 = vmatprep.subr.mxu0 0.0
  %161 = vmatpush1.msra.mxu0 0.0
  %162 = vmatprep.subr.mxu0 0.0
  %163 = vmatpush1.msra.mxu0 0.0
  %164 = vmatprep.subr.mxu0 0.0
  %165 = vmatpush1.msra.mxu0 0.0
  %166 = vmatprep.subr.mxu0 0.0
  %167 = vmatpush1.msra.mxu0 0.0
  %168 = vmatprep.subr.mxu0 0.0
  %169 = vmatpush1.msra.mxu0 0.0
  %170 = vmatprep.subr.mxu0 0.0
  %171 = vmatpush1.msra.mxu0 0.0
  %172 = vmatprep.subr.mxu0 0.0
  %173 = vmatpush1.msra.mxu0 0.0
  %174 = vmatprep.subr.mxu0 0.0
  %175 = vmatpush1.msra.mxu0 0.0
  %176 = vmatprep.subr.mxu0 0.0
  %177 = vmatpush1.msra.mxu0 %v148
  %178 = vmatprep.subr.mxu0 0.0
  %179 = vmatpush1.msra.mxu0 %v147
  %180 = vmatprep.subr.mxu0 0.0
  %181 = vmatpush1.msra.mxu0 %v146
  %182 = vmatprep.subr.mxu0 0.0
  %183 = vmatpush1.msra.mxu0 %v145
  %184 = vmatprep.subr.mxu0 0.0
  %185 = vmatpush2.msra.mxu0 0.0
  %186 = vmatprep.subr.mxu0 0.0
  %187 = vmatpush2.msra.mxu0 0.0
  %188 = vmatprep.subr.mxu0 0.0
  %189 = vmatpush2.msra.mxu0 0.0
  %190 = vmatprep.subr.mxu0 0.0
  %191 = vmatpush2.msra.mxu0 0.0
  %192 = vmatprep.subr.mxu0 0.0
  %193 = vmatpush2.msra.mxu0 0.0
  %194 = vmatprep.subr.mxu0 0.0
  %195 = vmatpush2.msra.mxu0 0.0
  %196 = vmatprep.subr.mxu0 0.0
  %197 = vmatpush2.msra.mxu0 0.0
  %198 = vmatprep.subr.mxu0 0.0
  %199 = vmatpush2.msra.mxu0 0.0
  %200 = vmatprep.subr.mxu0 0.0
  %201 = vmatpush2.msra.mxu0 0.0
  %202 = vmatprep.subr.mxu0 0.0
  %203 = vmatpush2.msra.mxu0 0.0
  %204 = vmatprep.subr.mxu0 0.0
  %205 = vmatpush2.msra.mxu0 0.0
  %206 = vmatprep.subr.mxu0 0.0
  %207 = vmatpush2.msra.mxu0 0.0
  %208 = vmatprep.subr.mxu0 0.0
  %209 = vmatpush2.msra.mxu0 0.0
  %210 = vmatprep.subr.mxu0 0.0
  %211 = vmatpush2.msra.mxu0 0.0
  %212 = vmatprep.subr.mxu0 0.0
  %213 = vmatpush2.msra.mxu0 0.0
  %214 = vmatprep.subr.mxu0 0.0
  %215 = vmatpush2.msra.mxu0 0.0
  %216 = vmatprep.mubr.f32.mxu0 0.0
  %217 = vmatmul.mubr.f32.gmra.mxu0 %v150
  %v218 = vpop.f32.mrf.mxu0
  %v219 = vadd.f32 0.0, %v218
  %v220 = vpop.f32.mrf.mxu0
  %221 = vdwg.mxu0
  %v222 = vadd.f32 %v143, %v219
  %v223 = vxor.u32 %v222, 2147483648
  %v224 = vmul.f32 %v223, 1.442695
  %v225 = vpow.pop %v224
  %v226 = vadd.f32 %v225, 1.0
  %v227 = vrcp.pop %v226
  %v228 = vmul.f32 1.0, %v227
  %v229 = vtanh.pop %v222
  %v230 = vld [vmem:[#allocation3] sm:$0xff]
  %232 = vrot.lane.b32.xlu0 %v230, 32
  %v233 = vpop.permute.xlu0 %232
  %v235 = vmul.f32 %v228, %v233
  %237 = vrot.lane.b32.xlu0 %v229, 64
  %v238 = vpop.permute.xlu0 %237
  %v240 = vmul.f32 %v228, %v238
  %242 = vrot.lane.b32.xlu0 %v240, 32
  %v243 = vpop.permute.xlu0 %242
  %v245 = vadd.f32 %v235, %v243
  %v246 = vtanh.pop %v245
  %248 = vrot.lane.b32.xlu0 %v246, 64
  %v249 = vpop.permute.xlu0 %248
  %v251 = vmul.f32 %v228, %v249
  %253 = vrot.lane.b32.xlu0 %v245, 96
  %v254 = vpop.permute.xlu0 %253
  %256 = vst.msk [vmem:[#allocation3] sm:$0xff] %vm13, %v254
  %258 = vrot.lane.b32.xlu0 %v251, 32
  %v259 = vpop.permute.xlu0 %258
  %261 = vst.msk [vmem:[#allocation2] sm:$0xff] %vm13, %v259
  %s262 = scalar_lea.vmem %s2, 8
  %263 = vst.msk [vmem:[%s262] sm:$0xff] %vm135, %v259
  %264 = vrot.lane.b32.xlu0 %v251, 16
  %v265 = vpop.permute.xlu0 %264
  %s267 = scalar_lea.vmem %s3, 48
  %268 = vst.msk [vmem:[%s267] sm:$0xff] %vm135, %v265
  %s269 = scalar_lea.vmem %s0, 16
  %v270 = vld [vmem:[%s269] sm:$0xff]
  %v271 = vld [vmem:[#allocation2] sm:$0xff]
  %v272 = vld [vmem:[%s1] sm:$0xff]
  %v273 = vld [vmem:[%s1 + $0x8] sm:$0xff]
  %v274 = vld [vmem:[%s1 + $0x10] sm:$0xff]
  %v275 = vld [vmem:[%s1 + $0x18] sm:$0xff]
  %v277 = vsel %vm13, %v271, 0
  %279 = vmatprep.subr.mxu0 0.0
  %280 = vmatpush1.msra.mxu0 0.0
  %281 = vmatprep.subr.mxu0 0.0
  %282 = vmatpush1.msra.mxu0 0.0
  %283 = vmatprep.subr.mxu0 0.0
  %284 = vmatpush1.msra.mxu0 0.0
  %285 = vmatprep.subr.mxu0 0.0
  %286 = vmatpush1.msra.mxu0 0.0
  %287 = vmatprep.subr.mxu0 0.0
  %288 = vmatpush1.msra.mxu0 0.0
  %289 = vmatprep.subr.mxu0 0.0
  %290 = vmatpush1.msra.mxu0 0.0
  %291 = vmatprep.subr.mxu0 0.0
  %292 = vmatpush1.msra.mxu0 0.0
  %293 = vmatprep.subr.mxu0 0.0
  %294 = vmatpush1.msra.mxu0 0.0
  %295 = vmatprep.subr.mxu0 0.0
  %296 = vmatpush1.msra.mxu0 0.0
  %297 = vmatprep.subr.mxu0 0.0
  %298 = vmatpush1.msra.mxu0 0.0
  %299 = vmatprep.subr.mxu0 0.0
  %300 = vmatpush1.msra.mxu0 0.0
  %301 = vmatprep.subr.mxu0 0.0
  %302 = vmatpush1.msra.mxu0 0.0
  %303 = vmatprep.subr.mxu0 0.0
  %304 = vmatpush1.msra.mxu0 %v275
  %305 = vmatprep.subr.mxu0 0.0
  %306 = vmatpush1.msra.mxu0 %v274
  %307 = vmatprep.subr.mxu0 0.0
  %308 = vmatpush1.msra.mxu0 %v273
  %309 = vmatprep.subr.mxu0 0.0
  %310 = vmatpush1.msra.mxu0 %v272
  %311 = vmatprep.subr.mxu0 0.0
  %312 = vmatpush2.msra.mxu0 0.0
  %313 = vmatprep.subr.mxu0 0.0
  %314 = vmatpush2.msra.mxu0 0.0
  %315 = vmatprep.subr.mxu0 0.0
  %316 = vmatpush2.msra.mxu0 0.0
  %317 = vmatprep.subr.mxu0 0.0
  %318 = vmatpush2.msra.mxu0 0.0
  %319 = vmatprep.subr.mxu0 0.0
  %320 = vmatpush2.msra.mxu0 0.0
  %321 = vmatprep.subr.mxu0 0.0
  %322 = vmatpush2.msra.mxu0 0.0
  %323 = vmatprep.subr.mxu0 0.0
  %324 = vmatpush2.msra.mxu0 0.0
  %325 = vmatprep.subr.mxu0 0.0
  %326 = vmatpush2.msra.mxu0 0.0
  %327 = vmatprep.subr.mxu0 0.0
  %328 = vmatpush2.msra.mxu0 0.0
  %329 = vmatprep.subr.mxu0 0.0
  %330 = vmatpush2.msra.mxu0 0.0
  %331 = vmatprep.subr.mxu0 0.0
  %332 = vmatpush2.msra.mxu0 0.0
  %333 = vmatprep.subr.mxu0 0.0
  %334 = vmatpush2.msra.mxu0 0.0
  %335 = vmatprep.subr.mxu0 0.0
  %336 = vmatpush2.msra.mxu0 0.0
  %337 = vmatprep.subr.mxu0 0.0
  %338 = vmatpush2.msra.mxu0 0.0
  %339 = vmatprep.subr.mxu0 0.0
  %340 = vmatpush2.msra.mxu0 0.0
  %341 = vmatprep.subr.mxu0 0.0
  %342 = vmatpush2.msra.mxu0 0.0
  %343 = vmatprep.mubr.f32.mxu0 0.0
  %344 = vmatmul.mubr.f32.gmra.mxu0 %v277
  %v345 = vpop.f32.mrf.mxu0
  %v346 = vadd.f32 0.0, %v345
  %v347 = vpop.f32.mrf.mxu0
  %348 = vdwg.mxu0
  %v349 = vadd.f32 %v270, %v346
  %v350 = vxor.u32 %v349, 2147483648
  %v351 = vmul.f32 %v350, 1.442695
  %v352 = vpow.pop %v351
  %v353 = vadd.f32 %v352, 1.0
  %v354 = vrcp.pop %v353
  %v355 = vmul.f32 1.0, %v354
  %v356 = vtanh.pop %v349
  %v357 = vld [vmem:[#allocation3] sm:$0xff]
  %359 = vrot.lane.b32.xlu0 %v357, 32
  %v360 = vpop.permute.xlu0 %359
  %v362 = vmul.f32 %v355, %v360
  %364 = vrot.lane.b32.xlu0 %v356, 64
  %v365 = vpop.permute.xlu0 %364
  %v367 = vmul.f32 %v355, %v365
  %369 = vrot.lane.b32.xlu0 %v367, 32
  %v370 = vpop.permute.xlu0 %369
  %v372 = vadd.f32 %v362, %v370
  %v373 = vtanh.pop %v372
  %375 = vrot.lane.b32.xlu0 %v373, 64
  %v376 = vpop.permute.xlu0 %375
  %v378 = vmul.f32 %v355, %v376
  %380 = vrot.lane.b32.xlu0 %v372, 96
  %v381 = vpop.permute.xlu0 %380
  %383 = vst.msk [vmem:[#allocation3] sm:$0xff] %vm13, %v381
  %385 = vrot.lane.b32.xlu0 %v378, 32
  %v386 = vpop.permute.xlu0 %385
  %388 = vst.msk [vmem:[#allocation2] sm:$0xff] %vm13, %v386
  %s389 = scalar_lea.vmem %s2, 16
  %390 = vst.msk [vmem:[%s389] sm:$0xff] %vm135, %v386
  %391 = vrot.lane.b32.xlu0 %v378, 16
  %v392 = vpop.permute.xlu0 %391
  %s394 = scalar_lea.vmem %s3, 40
  %395 = vst.msk [vmem:[%s394] sm:$0xff] %vm135, %v392
  %s396 = scalar_lea.vmem %s0, 24
  %v397 = vld [vmem:[%s396] sm:$0xff]
  %v398 = vld [vmem:[#allocation2] sm:$0xff]
  %v399 = vld [vmem:[%s1] sm:$0xff]
  %v400 = vld [vmem:[%s1 + $0x8] sm:$0xff]
  %v401 = vld [vmem:[%s1 + $0x10] sm:$0xff]
  %v402 = vld [vmem:[%s1 + $0x18] sm:$0xff]
  %v404 = vsel %vm13, %v398, 0
  %406 = vmatprep.subr.mxu0 0.0
  %407 = vmatpush1.msra.mxu0 0.0
  %408 = vmatprep.subr.mxu0 0.0
  %409 = vmatpush1.msra.mxu0 0.0
  %410 = vmatprep.subr.mxu0 0.0
  %411 = vmatpush1.msra.mxu0 0.0
  %412 = vmatprep.subr.mxu0 0.0
  %413 = vmatpush1.msra.mxu0 0.0
  %414 = vmatprep.subr.mxu0 0.0
  %415 = vmatpush1.msra.mxu0 0.0
  %416 = vmatprep.subr.mxu0 0.0
  %417 = vmatpush1.msra.mxu0 0.0
  %418 = vmatprep.subr.mxu0 0.0
  %419 = vmatpush1.msra.mxu0 0.0
  %420 = vmatprep.subr.mxu0 0.0
  %421 = vmatpush1.msra.mxu0 0.0
  %422 = vmatprep.subr.mxu0 0.0
  %423 = vmatpush1.msra.mxu0 0.0
  %424 = vmatprep.subr.mxu0 0.0
  %425 = vmatpush1.msra.mxu0 0.0
  %426 = vmatprep.subr.mxu0 0.0
  %427 = vmatpush1.msra.mxu0 0.0
  %428 = vmatprep.subr.mxu0 0.0
  %429 = vmatpush1.msra.mxu0 0.0
  %430 = vmatprep.subr.mxu0 0.0
  %431 = vmatpush1.msra.mxu0 %v402
  %432 = vmatprep.subr.mxu0 0.0
  %433 = vmatpush1.msra.mxu0 %v401
  %434 = vmatprep.subr.mxu0 0.0
  %435 = vmatpush1.msra.mxu0 %v400
  %436 = vmatprep.subr.mxu0 0.0
  %437 = vmatpush1.msra.mxu0 %v399
  %438 = vmatprep.subr.mxu0 0.0
  %439 = vmatpush2.msra.mxu0 0.0
  %440 = vmatprep.subr.mxu0 0.0
  %441 = vmatpush2.msra.mxu0 0.0
  %442 = vmatprep.subr.mxu0 0.0
  %443 = vmatpush2.msra.mxu0 0.0
  %444 = vmatprep.subr.mxu0 0.0
  %445 = vmatpush2.msra.mxu0 0.0
  %446 = vmatprep.subr.mxu0 0.0
  %447 = vmatpush2.msra.mxu0 0.0
  %448 = vmatprep.subr.mxu0 0.0
  %449 = vmatpush2.msra.mxu0 0.0
  %450 = vmatprep.subr.mxu0 0.0
  %451 = vmatpush2.msra.mxu0 0.0
  %452 = vmatprep.subr.mxu0 0.0
  %453 = vmatpush2.msra.mxu0 0.0
  %454 = vmatprep.subr.mxu0 0.0
  %455 = vmatpush2.msra.mxu0 0.0
  %456 = vmatprep.subr.mxu0 0.0
  %457 = vmatpush2.msra.mxu0 0.0
  %458 = vmatprep.subr.mxu0 0.0
  %459 = vmatpush2.msra.mxu0 0.0
  %460 = vmatprep.subr.mxu0 0.0
  %461 = vmatpush2.msra.mxu0 0.0
  %462 = vmatprep.subr.mxu0 0.0
  %463 = vmatpush2.msra.mxu0 0.0
  %464 = vmatprep.subr.mxu0 0.0
  %465 = vmatpush2.msra.mxu0 0.0
  %466 = vmatprep.subr.mxu0 0.0
  %467 = vmatpush2.msra.mxu0 0.0
  %468 = vmatprep.subr.mxu0 0.0
  %469 = vmatpush2.msra.mxu0 0.0
  %470 = vmatprep.mubr.f32.mxu0 0.0
  %471 = vmatmul.mubr.f32.gmra.mxu0 %v404
  %v472 = vpop.f32.mrf.mxu0
  %v473 = vadd.f32 0.0, %v472
  %v474 = vpop.f32.mrf.mxu0
  %475 = vdwg.mxu0
  %v476 = vadd.f32 %v397, %v473
  %v477 = vxor.u32 %v476, 2147483648
  %v478 = vmul.f32 %v477, 1.442695
  %v479 = vpow.pop %v478
  %v480 = vadd.f32 %v479, 1.0
  %v481 = vrcp.pop %v480
  %v482 = vmul.f32 1.0, %v481
  %v483 = vtanh.pop %v476
  %v484 = vld [vmem:[#allocation3] sm:$0xff]
  %486 = vrot.lane.b32.xlu0 %v484, 32
  %v487 = vpop.permute.xlu0 %486
  %v489 = vmul.f32 %v482, %v487
  %491 = vrot.lane.b32.xlu0 %v483, 64
  %v492 = vpop.permute.xlu0 %491
  %v494 = vmul.f32 %v482, %v492
  %496 = vrot.lane.b32.xlu0 %v494, 32
  %v497 = vpop.permute.xlu0 %496
  %v499 = vadd.f32 %v489, %v497
  %v500 = vtanh.pop %v499
  %502 = vrot.lane.b32.xlu0 %v500, 64
  %v503 = vpop.permute.xlu0 %502
  %v505 = vmul.f32 %v482, %v503
  %507 = vrot.lane.b32.xlu0 %v499, 96
  %v508 = vpop.permute.xlu0 %507
  %510 = vst.msk [vmem:[#allocation3] sm:$0xff] %vm13, %v508
  %512 = vrot.lane.b32.xlu0 %v505, 32
  %v513 = vpop.permute.xlu0 %512
  %515 = vst.msk [vmem:[#allocation2] sm:$0xff] %vm13, %v513
  %s516 = scalar_lea.vmem %s2, 24
  %517 = vst.msk [vmem:[%s516] sm:$0xff] %vm135, %v513
  %518 = vrot.lane.b32.xlu0 %v505, 16
  %v519 = vpop.permute.xlu0 %518
  %s521 = scalar_lea.vmem %s3, 32
  %522 = vst.msk [vmem:[%s521] sm:$0xff] %vm135, %v519
  %s523 = scalar_lea.vmem %s0, 32
  %v524 = vld [vmem:[%s523] sm:$0xff]
  %v525 = vld [vmem:[#allocation2] sm:$0xff]
  %v526 = vld [vmem:[%s1] sm:$0xff]
  %v527 = vld [vmem:[%s1 + $0x8] sm:$0xff]
  %v528 = vld [vmem:[%s1 + $0x10] sm:$0xff]
  %v529 = vld [vmem:[%s1 + $0x18] sm:$0xff]
  %v531 = vsel %vm13, %v525, 0
  %533 = vmatprep.subr.mxu0 0.0
  %534 = vmatpush1.msra.mxu0 0.0
  %535 = vmatprep.subr.mxu0 0.0
  %536 = vmatpush1.msra.mxu0 0.0
  %537 = vmatprep.subr.mxu0 0.0
  %538 = vmatpush1.msra.mxu0 0.0
  %539 = vmatprep.subr.mxu0 0.0
  %540 = vmatpush1.msra.mxu0 0.0
  %541 = vmatprep.subr.mxu0 0.0
  %542 = vmatpush1.msra.mxu0 0.0
  %543 = vmatprep.subr.mxu0 0.0
  %544 = vmatpush1.msra.mxu0 0.0
  %545 = vmatprep.subr.mxu0 0.0
  %546 = vmatpush1.msra.mxu0 0.0
  %547 = vmatprep.subr.mxu0 0.0
  %548 = vmatpush1.msra.mxu0 0.0
  %549 = vmatprep.subr.mxu0 0.0
  %550 = vmatpush1.msra.mxu0 0.0
  %551 = vmatprep.subr.mxu0 0.0
  %552 = vmatpush1.msra.mxu0 0.0
  %553 = vmatprep.subr.mxu0 0.0
  %554 = vmatpush1.msra.mxu0 0.0
  %555 = vmatprep.subr.mxu0 0.0
  %556 = vmatpush1.msra.mxu0 0.0
  %557 = vmatprep.subr.mxu0 0.0
  %558 = vmatpush1.msra.mxu0 %v529
  %559 = vmatprep.subr.mxu0 0.0
  %560 = vmatpush1.msra.mxu0 %v528
  %561 = vmatprep.subr.mxu0 0.0
  %562 = vmatpush1.msra.mxu0 %v527
  %563 = vmatprep.subr.mxu0 0.0
  %564 = vmatpush1.msra.mxu0 %v526
  %565 = vmatprep.subr.mxu0 0.0
  %566 = vmatpush2.msra.mxu0 0.0
  %567 = vmatprep.subr.mxu0 0.0
  %568 = vmatpush2.msra.mxu0 0.0
  %569 = vmatprep.subr.mxu0 0.0
  %570 = vmatpush2.msra.mxu0 0.0
  %571 = vmatprep.subr.mxu0 0.0
  %572 = vmatpush2.msra.mxu0 0.0
  %573 = vmatprep.subr.mxu0 0.0
  %574 = vmatpush2.msra.mxu0 0.0
  %575 = vmatprep.subr.mxu0 0.0
  %576 = vmatpush2.msra.mxu0 0.0
  %577 = vmatprep.subr.mxu0 0.0
  %578 = vmatpush2.msra.mxu0 0.0
  %579 = vmatprep.subr.mxu0 0.0
  %580 = vmatpush2.msra.mxu0 0.0
  %581 = vmatprep.subr.mxu0 0.0
  %582 = vmatpush2.msra.mxu0 0.0
  %583 = vmatprep.subr.mxu0 0.0
  %584 = vmatpush2.msra.mxu0 0.0
  %585 = vmatprep.subr.mxu0 0.0
  %586 = vmatpush2.msra.mxu0 0.0
  %587 = vmatprep.subr.mxu0 0.0
  %588 = vmatpush2.msra.mxu0 0.0
  %589 = vmatprep.subr.mxu0 0.0
  %590 = vmatpush2.msra.mxu0 0.0
  %591 = vmatprep.subr.mxu0 0.0
  %592 = vmatpush2.msra.mxu0 0.0
  %593 = vmatprep.subr.mxu0 0.0
  %594 = vmatpush2.msra.mxu0 0.0
  %595 = vmatprep.subr.mxu0 0.0
  %596 = vmatpush2.msra.mxu0 0.0
  %597 = vmatprep.mubr.f32.mxu0 0.0
  %598 = vmatmul.mubr.f32.gmra.mxu0 %v531
  %v599 = vpop.f32.mrf.mxu0
  %v600 = vadd.f32 0.0, %v599
  %v601 = vpop.f32.mrf.mxu0
  %602 = vdwg.mxu0
  %v603 = vadd.f32 %v524, %v600
  %v604 = vxor.u32 %v603, 2147483648
  %v605 = vmul.f32 %v604, 1.442695
  %v606 = vpow.pop %v605
  %v607 = vadd.f32 %v606, 1.0
  %v608 = vrcp.pop %v607
  %v609 = vmul.f32 1.0, %v608
  %v610 = vtanh.pop %v603
  %v611 = vld [vmem:[#allocation3] sm:$0xff]
  %613 = vrot.lane.b32.xlu0 %v611, 32
  %v614 = vpop.permute.xlu0 %613
  %v616 = vmul.f32 %v609, %v614
  %618 = vrot.lane.b32.xlu0 %v610, 64
  %v619 = vpop.permute.xlu0 %618
  %v621 = vmul.f32 %v609, %v619
  %623 = vrot.lane.b32.xlu0 %v621, 32
  %v624 = vpop.permute.xlu0 %623
  %v626 = vadd.f32 %v616, %v624
  %v627 = vtanh.pop %v626
  %629 = vrot.lane.b32.xlu0 %v627, 64
  %v630 = vpop.permute.xlu0 %629
  %v632 = vmul.f32 %v609, %v630
  %634 = vrot.lane.b32.xlu0 %v626, 96
  %v635 = vpop.permute.xlu0 %634
  %637 = vst.msk [vmem:[#allocation3] sm:$0xff] %vm13, %v635
  %639 = vrot.lane.b32.xlu0 %v632, 32
  %v640 = vpop.permute.xlu0 %639
  %642 = vst.msk [vmem:[#allocation2] sm:$0xff] %vm13, %v640
  %s643 = scalar_lea.vmem %s2, 32
  %644 = vst.msk [vmem:[%s643] sm:$0xff] %vm135, %v640
  %645 = vrot.lane.b32.xlu0 %v632, 16
  %v646 = vpop.permute.xlu0 %645
  %s648 = scalar_lea.vmem %s3, 24
  %649 = vst.msk [vmem:[%s648] sm:$0xff] %vm135, %v646
  %s650 = scalar_lea.vmem %s0, 40
  %v651 = vld [vmem:[%s650] sm:$0xff]
  %v652 = vld [vmem:[#allocation2] sm:$0xff]
  %v653 = vld [vmem:[%s1] sm:$0xff]
  %v654 = vld [vmem:[%s1 + $0x8] sm:$0xff]
  %v655 = vld [vmem:[%s1 + $0x10] sm:$0xff]
  %v656 = vld [vmem:[%s1 + $0x18] sm:$0xff]
  %v658 = vsel %vm13, %v652, 0
  %660 = vmatprep.subr.mxu0 0.0
  %661 = vmatpush1.msra.mxu0 0.0
  %662 = vmatprep.subr.mxu0 0.0
  %663 = vmatpush1.msra.mxu0 0.0
  %664 = vmatprep.subr.mxu0 0.0
  %665 = vmatpush1.msra.mxu0 0.0
  %666 = vmatprep.subr.mxu0 0.0
  %667 = vmatpush1.msra.mxu0 0.0
  %668 = vmatprep.subr.mxu0 0.0
  %669 = vmatpush1.msra.mxu0 0.0
  %670 = vmatprep.subr.mxu0 0.0
  %671 = vmatpush1.msra.mxu0 0.0
  %672 = vmatprep.subr.mxu0 0.0
  %673 = vmatpush1.msra.mxu0 0.0
  %674 = vmatprep.subr.mxu0 0.0
  %675 = vmatpush1.msra.mxu0 0.0
  %676 = vmatprep.subr.mxu0 0.0
  %677 = vmatpush1.msra.mxu0 0.0
  %678 = vmatprep.subr.mxu0 0.0
  %679 = vmatpush1.msra.mxu0 0.0
  %680 = vmatprep.subr.mxu0 0.0
  %681 = vmatpush1.msra.mxu0 0.0
  %682 = vmatprep.subr.mxu0 0.0
  %683 = vmatpush1.msra.mxu0 0.0
  %684 = vmatprep.subr.mxu0 0.0
  %685 = vmatpush1.msra.mxu0 %v656
  %686 = vmatprep.subr.mxu0 0.0
  %687 = vmatpush1.msra.mxu0 %v655
  %688 = vmatprep.subr.mxu0 0.0
  %689 = vmatpush1.msra.mxu0 %v654
  %690 = vmatprep.subr.mxu0 0.0
  %691 = vmatpush1.msra.mxu0 %v653
  %692 = vmatprep.subr.mxu0 0.0
  %693 = vmatpush2.msra.mxu0 0.0
  %694 = vmatprep.subr.mxu0 0.0
  %695 = vmatpush2.msra.mxu0 0.0
  %696 = vmatprep.subr.mxu0 0.0
  %697 = vmatpush2.msra.mxu0 0.0
  %698 = vmatprep.subr.mxu0 0.0
  %699 = vmatpush2.msra.mxu0 0.0
  %700 = vmatprep.subr.mxu0 0.0
  %701 = vmatpush2.msra.mxu0 0.0
  %702 = vmatprep.subr.mxu0 0.0
  %703 = vmatpush2.msra.mxu0 0.0
  %704 = vmatprep.subr.mxu0 0.0
  %705 = vmatpush2.msra.mxu0 0.0
  %706 = vmatprep.subr.mxu0 0.0
  %707 = vmatpush2.msra.mxu0 0.0
  %708 = vmatprep.subr.mxu0 0.0
  %709 = vmatpush2.msra.mxu0 0.0
  %710 = vmatprep.subr.mxu0 0.0
  %711 = vmatpush2.msra.mxu0 0.0
  %712 = vmatprep.subr.mxu0 0.0
  %713 = vmatpush2.msra.mxu0 0.0
  %714 = vmatprep.subr.mxu0 0.0
  %715 = vmatpush2.msra.mxu0 0.0
  %716 = vmatprep.subr.mxu0 0.0
  %717 = vmatpush2.msra.mxu0 0.0
  %718 = vmatprep.subr.mxu0 0.0
  %719 = vmatpush2.msra.mxu0 0.0
  %720 = vmatprep.subr.mxu0 0.0
  %721 = vmatpush2.msra.mxu0 0.0
  %722 = vmatprep.subr.mxu0 0.0
  %723 = vmatpush2.msra.mxu0 0.0
  %724 = vmatprep.mubr.f32.mxu0 0.0
  %725 = vmatmul.mubr.f32.gmra.mxu0 %v658
  %v726 = vpop.f32.mrf.mxu0
  %v727 = vadd.f32 0.0, %v726
  %v728 = vpop.f32.mrf.mxu0
  %729 = vdwg.mxu0
  %v730 = vadd.f32 %v651, %v727
  %v731 = vxor.u32 %v730, 2147483648
  %v732 = vmul.f32 %v731, 1.442695
  %v733 = vpow.pop %v732
  %v734 = vadd.f32 %v733, 1.0
  %v735 = vrcp.pop %v734
  %v736 = vmul.f32 1.0, %v735
  %v737 = vtanh.pop %v730
  %v738 = vld [vmem:[#allocation3] sm:$0xff]
  %740 = vrot.lane.b32.xlu0 %v738, 32
  %v741 = vpop.permute.xlu0 %740
  %v743 = vmul.f32 %v736, %v741
  %745 = vrot.lane.b32.xlu0 %v737, 64
  %v746 = vpop.permute.xlu0 %745
  %v748 = vmul.f32 %v736, %v746
  %750 = vrot.lane.b32.xlu0 %v748, 32
  %v751 = vpop.permute.xlu0 %750
  %v753 = vadd.f32 %v743, %v751
  %v754 = vtanh.pop %v753
  %756 = vrot.lane.b32.xlu0 %v754, 64
  %v757 = vpop.permute.xlu0 %756
  %v759 = vmul.f32 %v736, %v757
  %761 = vrot.lane.b32.xlu0 %v753, 96
  %v762 = vpop.permute.xlu0 %761
  %764 = vst.msk [vmem:[#allocation3] sm:$0xff] %vm13, %v762
  %766 = vrot.lane.b32.xlu0 %v759, 32
  %v767 = vpop.permute.xlu0 %766
  %769 = vst.msk [vmem:[#allocation2] sm:$0xff] %vm13, %v767
  %s770 = scalar_lea.vmem %s2, 40
  %771 = vst.msk [vmem:[%s770] sm:$0xff] %vm135, %v767
  %772 = vrot.lane.b32.xlu0 %v759, 16
  %v773 = vpop.permute.xlu0 %772
  %s775 = scalar_lea.vmem %s3, 16
  %776 = vst.msk [vmem:[%s775] sm:$0xff] %vm135, %v773
  %s777 = scalar_lea.vmem %s0, 48
  %v778 = vld [vmem:[%s777] sm:$0xff]
  %v779 = vld [vmem:[#allocation2] sm:$0xff]
  %v780 = vld [vmem:[%s1] sm:$0xff]
  %v781 = vld [vmem:[%s1 + $0x8] sm:$0xff]
  %v782 = vld [vmem:[%s1 + $0x10] sm:$0xff]
  %v783 = vld [vmem:[%s1 + $0x18] sm:$0xff]
  %v785 = vsel %vm13, %v779, 0
  %787 = vmatprep.subr.mxu0 0.0
  %788 = vmatpush1.msra.mxu0 0.0
  %789 = vmatprep.subr.mxu0 0.0
  %790 = vmatpush1.msra.mxu0 0.0
  %791 = vmatprep.subr.mxu0 0.0
  %792 = vmatpush1.msra.mxu0 0.0
  %793 = vmatprep.subr.mxu0 0.0
  %794 = vmatpush1.msra.mxu0 0.0
  %795 = vmatprep.subr.mxu0 0.0
  %796 = vmatpush1.msra.mxu0 0.0
  %797 = vmatprep.subr.mxu0 0.0
  %798 = vmatpush1.msra.mxu0 0.0
  %799 = vmatprep.subr.mxu0 0.0
  %800 = vmatpush1.msra.mxu0 0.0
  %801 = vmatprep.subr.mxu0 0.0
  %802 = vmatpush1.msra.mxu0 0.0
  %803 = vmatprep.subr.mxu0 0.0
  %804 = vmatpush1.msra.mxu0 0.0
  %805 = vmatprep.subr.mxu0 0.0
  %806 = vmatpush1.msra.mxu0 0.0
  %807 = vmatprep.subr.mxu0 0.0
  %808 = vmatpush1.msra.mxu0 0.0
  %809 = vmatprep.subr.mxu0 0.0
  %810 = vmatpush1.msra.mxu0 0.0
  %811 = vmatprep.subr.mxu0 0.0
  %812 = vmatpush1.msra.mxu0 %v783
  %813 = vmatprep.subr.mxu0 0.0
  %814 = vmatpush1.msra.mxu0 %v782
  %815 = vmatprep.subr.mxu0 0.0
  %816 = vmatpush1.msra.mxu0 %v781
  %817 = vmatprep.subr.mxu0 0.0
  %818 = vmatpush1.msra.mxu0 %v780
  %819 = vmatprep.subr.mxu0 0.0
  %820 = vmatpush2.msra.mxu0 0.0
  %821 = vmatprep.subr.mxu0 0.0
  %822 = vmatpush2.msra.mxu0 0.0
  %823 = vmatprep.subr.mxu0 0.0
  %824 = vmatpush2.msra.mxu0 0.0
  %825 = vmatprep.subr.mxu0 0.0
  %826 = vmatpush2.msra.mxu0 0.0
  %827 = vmatprep.subr.mxu0 0.0
  %828 = vmatpush2.msra.mxu0 0.0
  %829 = vmatprep.subr.mxu0 0.0
  %830 = vmatpush2.msra.mxu0 0.0
  %831 = vmatprep.subr.mxu0 0.0
  %832 = vmatpush2.msra.mxu0 0.0
  %833 = vmatprep.subr.mxu0 0.0
  %834 = vmatpush2.msra.mxu0 0.0
  %835 = vmatprep.subr.mxu0 0.0
  %836 = vmatpush2.msra.mxu0 0.0
  %837 = vmatprep.subr.mxu0 0.0
  %838 = vmatpush2.msra.mxu0 0.0
  %839 = vmatprep.subr.mxu0 0.0
  %840 = vmatpush2.msra.mxu0 0.0
  %841 = vmatprep.subr.mxu0 0.0
  %842 = vmatpush2.msra.mxu0 0.0
  %843 = vmatprep.subr.mxu0 0.0
  %844 = vmatpush2.msra.mxu0 0.0
  %845 = vmatprep.subr.mxu0 0.0
  %846 = vmatpush2.msra.mxu0 0.0
  %847 = vmatprep.subr.mxu0 0.0
  %848 = vmatpush2.msra.mxu0 0.0
  %849 = vmatprep.subr.mxu0 0.0
  %850 = vmatpush2.msra.mxu0 0.0
  %851 = vmatprep.mubr.f32.mxu0 0.0
  %852 = vmatmul.mubr.f32.gmra.mxu0 %v785
  %v853 = vpop.f32.mrf.mxu0
  %v854 = vadd.f32 0.0, %v853
  %v855 = vpop.f32.mrf.mxu0
  %856 = vdwg.mxu0
  %v857 = vadd.f32 %v778, %v854
  %v858 = vxor.u32 %v857, 2147483648
  %v859 = vmul.f32 %v858, 1.442695
  %v860 = vpow.pop %v859
  %v861 = vadd.f32 %v860, 1.0
  %v862 = vrcp.pop %v861
  %v863 = vmul.f32 1.0, %v862
  %v864 = vtanh.pop %v857
  %v865 = vld [vmem:[#allocation3] sm:$0xff]
  %867 = vrot.lane.b32.xlu0 %v865, 32
  %v868 = vpop.permute.xlu0 %867
  %v870 = vmul.f32 %v863, %v868
  %872 = vrot.lane.b32.xlu0 %v864, 64
  %v873 = vpop.permute.xlu0 %872
  %v875 = vmul.f32 %v863, %v873
  %877 = vrot.lane.b32.xlu0 %v875, 32
  %v878 = vpop.permute.xlu0 %877
  %v880 = vadd.f32 %v870, %v878
  %v881 = vtanh.pop %v880
  %883 = vrot.lane.b32.xlu0 %v881, 64
  %v884 = vpop.permute.xlu0 %883
  %v886 = vmul.f32 %v863, %v884
  %888 = vrot.lane.b32.xlu0 %v880, 96
  %v889 = vpop.permute.xlu0 %888
  %891 = vst.msk [vmem:[#allocation3] sm:$0xff] %vm13, %v889
  %893 = vrot.lane.b32.xlu0 %v886, 32
  %v894 = vpop.permute.xlu0 %893
  %896 = vst.msk [vmem:[#allocation2] sm:$0xff] %vm13, %v894
  %s897 = scalar_lea.vmem %s2, 48
  %898 = vst.msk [vmem:[%s897] sm:$0xff] %vm135, %v894
  %899 = vrot.lane.b32.xlu0 %v886, 16
  %v900 = vpop.permute.xlu0 %899
  %s902 = scalar_lea.vmem %s3, 8
  %903 = vst.msk [vmem:[%s902] sm:$0xff] %vm135, %v900
  %s904 = scalar_lea.vmem %s0, 56
  %v905 = vld [vmem:[%s904] sm:$0xff]
  %v906 = vld [vmem:[#allocation2] sm:$0xff]
  %v907 = vld [vmem:[%s1] sm:$0xff]
  %v908 = vld [vmem:[%s1 + $0x8] sm:$0xff]
  %v909 = vld [vmem:[%s1 + $0x10] sm:$0xff]
  %v910 = vld [vmem:[%s1 + $0x18] sm:$0xff]
  %v912 = vsel %vm13, %v906, 0
  %914 = vmatprep.subr.mxu0 0.0
  %915 = vmatpush1.msra.mxu0 0.0
  %916 = vmatprep.subr.mxu0 0.0
  %917 = vmatpush1.msra.mxu0 0.0
  %918 = vmatprep.subr.mxu0 0.0
  %919 = vmatpush1.msra.mxu0 0.0
  %920 = vmatprep.subr.mxu0 0.0
  %921 = vmatpush1.msra.mxu0 0.0
  %922 = vmatprep.subr.mxu0 0.0
  %923 = vmatpush1.msra.mxu0 0.0
  %924 = vmatprep.subr.mxu0 0.0
  %925 = vmatpush1.msra.mxu0 0.0
  %926 = vmatprep.subr.mxu0 0.0
  %927 = vmatpush1.msra.mxu0 0.0
  %928 = vmatprep.subr.mxu0 0.0
  %929 = vmatpush1.msra.mxu0 0.0
  %930 = vmatprep.subr.mxu0 0.0
  %931 = vmatpush1.msra.mxu0 0.0
  %932 = vmatprep.subr.mxu0 0.0
  %933 = vmatpush1.msra.mxu0 0.0
  %934 = vmatprep.subr.mxu0 0.0
  %935 = vmatpush1.msra.mxu0 0.0
  %936 = vmatprep.subr.mxu0 0.0
  %937 = vmatpush1.msra.mxu0 0.0
  %938 = vmatprep.subr.mxu0 0.0
  %939 = vmatpush1.msra.mxu0 %v910
  %940 = vmatprep.subr.mxu0 0.0
  %941 = vmatpush1.msra.mxu0 %v909
  %942 = vmatprep.subr.mxu0 0.0
  %943 = vmatpush1.msra.mxu0 %v908
  %944 = vmatprep.subr.mxu0 0.0
  %945 = vmatpush1.msra.mxu0 %v907
  %946 = vmatprep.subr.mxu0 0.0
  %947 = vmatpush2.msra.mxu0 0.0
  %948 = vmatprep.subr.mxu0 0.0
  %949 = vmatpush2.msra.mxu0 0.0
  %950 = vmatprep.subr.mxu0 0.0
  %951 = vmatpush2.msra.mxu0 0.0
  %952 = vmatprep.subr.mxu0 0.0
  %953 = vmatpush2.msra.mxu0 0.0
  %954 = vmatprep.subr.mxu0 0.0
  %955 = vmatpush2.msra.mxu0 0.0
  %956 = vmatprep.subr.mxu0 0.0
  %957 = vmatpush2.msra.mxu0 0.0
  %958 = vmatprep.subr.mxu0 0.0
  %959 = vmatpush2.msra.mxu0 0.0
  %960 = vmatprep.subr.mxu0 0.0
  %961 = vmatpush2.msra.mxu0 0.0
  %962 = vmatprep.subr.mxu0 0.0
  %963 = vmatpush2.msra.mxu0 0.0
  %964 = vmatprep.subr.mxu0 0.0
  %965 = vmatpush2.msra.mxu0 0.0
  %966 = vmatprep.subr.mxu0 0.0
  %967 = vmatpush2.msra.mxu0 0.0
  %968 = vmatprep.subr.mxu0 0.0
  %969 = vmatpush2.msra.mxu0 0.0
  %970 = vmatprep.subr.mxu0 0.0
  %971 = vmatpush2.msra.mxu0 0.0
  %972 = vmatprep.subr.mxu0 0.0
  %973 = vmatpush2.msra.mxu0 0.0
  %974 = vmatprep.subr.mxu0 0.0
  %975 = vmatpush2.msra.mxu0 0.0
  %976 = vmatprep.subr.mxu0 0.0
  %977 = vmatpush2.msra.mxu0 0.0
  %978 = vmatprep.mubr.f32.mxu0 0.0
  %979 = vmatmul.mubr.f32.gmra.mxu0 %v912
  %v980 = vpop.f32.mrf.mxu0
  %v981 = vadd.f32 0.0, %v980
  %v982 = vpop.f32.mrf.mxu0
  %983 = vdwg.mxu0
  %v984 = vadd.f32 %v905, %v981
  %v985 = vxor.u32 %v984, 2147483648
  %v986 = vmul.f32 %v985, 1.442695
  %v987 = vpow.pop %v986
  %v988 = vadd.f32 %v987, 1.0
  %v989 = vrcp.pop %v988
  %v990 = vmul.f32 1.0, %v989
  %v991 = vtanh.pop %v984
  %v992 = vld [vmem:[#allocation3] sm:$0xff]
  %994 = vrot.lane.b32.xlu0 %v992, 32
  %v995 = vpop.permute.xlu0 %994
  %v997 = vmul.f32 %v990, %v995
  %999 = vrot.lane.b32.xlu0 %v991, 64
  %v1000 = vpop.permute.xlu0 %999
  %v1002 = vmul.f32 %v990, %v1000
  %1004 = vrot.lane.b32.xlu0 %v1002, 32
  %v1005 = vpop.permute.xlu0 %1004
  %v1007 = vadd.f32 %v997, %v1005
  %v1008 = vtanh.pop %v1007
  %1010 = vrot.lane.b32.xlu0 %v1008, 64
  %v1011 = vpop.permute.xlu0 %1010
  %v1013 = vmul.f32 %v990, %v1011
  %1015 = vrot.lane.b32.xlu0 %v1007, 96
  %v1016 = vpop.permute.xlu0 %1015
  %1018 = vst.msk [vmem:[#allocation3] sm:$0xff] %vm13, %v1016
  %1020 = vrot.lane.b32.xlu0 %v1013, 32
  %v1021 = vpop.permute.xlu0 %1020
  %1023 = vst.msk [vmem:[#allocation2] sm:$0xff] %vm13, %v1021
  %s1024 = scalar_lea.vmem %s2, 56
  %1025 = vst.msk [vmem:[%s1024] sm:$0xff] %vm135, %v1021
  %1026 = vrot.lane.b32.xlu0 %v1013, 16
  %v1027 = vpop.permute.xlu0 %1026
  %1029 = vst.msk [vmem:[%s3] sm:$0xff] %vm135, %v1027
  // Predicated region
  $region10: #{bilstm_crf_forward.6} parent=0 // pred_check
    _
  $region11: #{bilstm_crf_forward.6} parent=0 // pred_check_branch
    %1031 = sbr.rel (0) target = $region13
  $region12: #{bilstm_crf_forward.6} parent=0 // pred_region
    _
  $region13: #{bilstm_crf_forward.6} parent=0 // pred_fallthru
    _
  // Predicated region
  $region14: #{bilstm_crf_forward.6} parent=0 // pred_check
    _
  $region15: #{bilstm_crf_forward.6} parent=0 // pred_check_branch
    %1033 = sbr.rel (0) target = $region17
  $region16: #{bilstm_crf_forward.6} parent=0 // pred_region
    _
  $region17: #{bilstm_crf_forward.6} parent=0 // pred_fallthru
    _
  // Predicated region
  $region18: #{bilstm_crf_forward.6} parent=0 // pred_check
    _
  $region19: #{bilstm_crf_forward.6} parent=0 // pred_check_branch
    %1035 = sbr.rel (0) target = $region21
  $region20: #{bilstm_crf_forward.6} parent=0 // pred_region
    _
  $region21: #{bilstm_crf_forward.6} parent=0 // pred_fallthru
    _
  // Predicated region
  $region22: #{bilstm_crf_forward.6} parent=0 // pred_check
    _
  $region23: #{bilstm_crf_forward.6} parent=0 // pred_check_branch
    %1037 = sbr.rel (0) target = $region25
  $region24: #{bilstm_crf_forward.6} parent=0 // pred_region
    _
  $region25: #{bilstm_crf_forward.6} parent=0 // pred_fallthru
    _

</llo_original>
